<compile_context>
chip_gen: v7x
topology: tpu7x:2x2x1
jax: 0.10.0
libtpu: 0.0.40
codegen_flags: <defaults>
</compile_context>

<pallas_src>
import functools

import jax
import jax.numpy as jnp
from jax import lax
from jax.experimental import pallas as pl
from jax.experimental.pallas import tpu as pltpu

HIDDEN = 256
HEAD_PAD = 128          # lane-dense fused head width (must be >= 2 * action_dim)
LN_EPS = 1e-5           # nn.LayerNorm default eps
NEG_SLOPE = 0.01        # F.leaky_relu default negative_slope
LOG_STD_MIN = -10.0
LOG_STD_MAX = 1.0


def _round_up(n, m):
    return ((n + m - 1) // m) * m


def _layernorm(h, gamma, beta):
    # Single traversal: sum and sum-of-squares, var = E[h^2] - mean^2 (f32 math).
    inv_n = 1.0 / h.shape[-1]
    s = jnp.sum(h, axis=-1, keepdims=True)
    ss = jnp.sum(h * h, axis=-1, keepdims=True)
    mean = s * inv_n
    var = ss * inv_n - mean * mean
    return (h - mean) * lax.rsqrt(var + LN_EPS) * gamma + beta


def _leaky_relu(h):
    return jnp.where(h >= 0, h, NEG_SLOPE * h)


def policy_kernel(x_ref,
                  w1_ref, b1_ref, g1_ref, be1_ref,
                  w2_ref, b2_ref, g2_ref, be2_ref,
                  wh_ref, bh_ref,
                  out_ref, *, n_sub):
    tb = x_ref.shape[0]
    sub = tb // n_sub

    # Weights are VMEM-resident (constant index_maps); load once per grid step.
    w1 = w1_ref[...]          # bf16 (state_dim, HIDDEN)
    b1 = b1_ref[...]          # f32  (1, HIDDEN)
    g1 = g1_ref[...]
    be1 = be1_ref[...]
    w2 = w2_ref[...]          # bf16 (HIDDEN, HIDDEN)
    b2 = b2_ref[...]
    g2 = g2_ref[...]
    be2 = be2_ref[...]
    wh = wh_ref[...]          # bf16 (HIDDEN, HEAD_PAD)
    bh = bh_ref[...]          # f32  (1, HEAD_PAD)

    # Static sub-chunk loop: lets MXU work of chunk k+1 overlap the LayerNorm
    # XLU/EUP/VPU work of chunk k.
    for c in range(n_sub):
        rows = pl.ds(c * sub, sub)

        x = x_ref[rows, :].astype(jnp.bfloat16)

        # fc_1 -> ln_1 -> leaky_relu   (bf16 operands, f32 accumulate / elementwise)
        h = jnp.dot(x, w1, preferred_element_type=jnp.float32) + b1
        h = _leaky_relu(_layernorm(h, g1, be1))

        # fc_2 -> ln_2 -> leaky_relu
        h = jnp.dot(h.astype(jnp.bfloat16), w2,
                    preferred_element_type=jnp.float32) + b2
        h = _leaky_relu(_layernorm(h, g2, be2))

        # fused heads: lanes [0, A) = mu, lanes [A, 2A) = log_std, rest zero pad.
        # log_std clamp is applied in the wrapper after slicing.
        head = jnp.dot(h.astype(jnp.bfloat16), wh,
                       preferred_element_type=jnp.float32) + bh
        out_ref[rows, :] = head.astype(out_ref.dtype)


def policy_forward(x, params, *, block_b=512, min_grid_steps=1, n_sub=2):
    """x: (B, state_dim) f32.  Returns (mu, log_std): each (B, action_dim) f32.

    block_b: max batch-tile rows (sweep 256/512/1024 at large B).
    min_grid_steps: set to 2 on v7x so both TensorCores get grid steps; leave at 1
    on single-TC chips (v5e/v6e) so the whole padded batch is one fat step.
    """
    B, state_dim = x.shape
    action_dim = int(params["action_dim"])

    sub_align = 8 * n_sub                       # each sub-chunk >= 8 sublanes
    block_b = _round_up(block_b, sub_align)
    target = -(-B // max(min_grid_steps, 1))    # ceil(B / min_grid_steps)
    tb = min(block_b, max(_round_up(max(target, 1), sub_align), sub_align))
    b_pad = _round_up(max(B, tb), tb)
    if b_pad != B:
        x = jnp.pad(x, ((0, b_pad - B), (0, 0)))

    args = (
        x,
        params["w1"], params["b1"], params["ln1_g"], params["ln1_b"],
        params["w2"], params["b2"], params["ln2_g"], params["ln2_b"],
        params["w_heads"], params["b_heads"],
    )

    def const_spec(shape):
        # Same block every grid step -> DMA'd once, stays VMEM-resident.
        return pl.BlockSpec(shape, lambda i: (0, 0))

    in_specs = [pl.BlockSpec((tb, state_dim), lambda i: (i, 0))]
    in_specs += [const_spec(a.shape) for a in args[1:]]

    flops = 2 * b_pad * (state_dim * HIDDEN + HIDDEN * HIDDEN + HIDDEN * HEAD_PAD)
    weight_bytes = sum(int(a.size) * a.dtype.itemsize for a in args[1:])
    bytes_accessed = (b_pad * state_dim * 4) + (b_pad * HEAD_PAD * 4) + weight_bytes

    out = pl.pallas_call(
        functools.partial(policy_kernel, n_sub=n_sub),
        out_shape=jax.ShapeDtypeStruct((b_pad, HEAD_PAD), jnp.float32),
        grid=(b_pad // tb,),
        in_specs=in_specs,
        out_specs=pl.BlockSpec((tb, HEAD_PAD), lambda i: (i, 0)),
        compiler_params=pltpu.CompilerParams(
            dimension_semantics=("parallel",)),
        cost_estimate=pl.CostEstimate(
            flops=flops,
            transcendentals=2 * b_pad,          # one rsqrt per row per LayerNorm
            bytes_accessed=bytes_accessed),
    )(*args)

    mu = out[:B, :action_dim]
    log_std = jnp.clip(out[:B, action_dim:2 * action_dim], LOG_STD_MIN, LOG_STD_MAX)
    return mu, log_std


def init_params(key, state_dim, action_dim):
    """Deterministic init mirroring PolicyNetwork._init_weights.

    Linear weights are stored PRE-TRANSPOSED as (in_features, out_features) so the
    kernel computes y = x @ W + b on the MXU, and in bf16 (native MXU rate); biases
    and LayerNorm params stay f32.  The two heads are packed into one zero-padded
    (HIDDEN, HEAD_PAD) weight / (1, HEAD_PAD) bias.
    """
    assert 2 * action_dim <= HEAD_PAD
    k1, k2, k3, k4, k5, k6 = jax.random.split(key, 6)

    def kaiming(k, fan_in, fan_out):
        # kaiming_normal_(a=0.01, nonlinearity='leaky_relu'), fan_in mode
        gain = jnp.sqrt(2.0 / (1.0 + 0.01 ** 2))
        std = gain / jnp.sqrt(float(fan_in))
        return jax.random.normal(k, (fan_in, fan_out), jnp.float32) * std

    def unif(k, shape):
        return jax.random.uniform(k, shape, jnp.float32, -0.003, 0.003)

    w_mu = unif(k3, (HIDDEN, action_dim))
    b_mu = unif(k4, (1, action_dim))
    w_std = unif(k5, (HIDDEN, action_dim))
    b_std = unif(k6, (1, action_dim))

    pad = HEAD_PAD - 2 * action_dim
    w_heads = jnp.pad(jnp.concatenate([w_mu, w_std], axis=1), ((0, 0), (0, pad)))
    b_heads = jnp.pad(jnp.concatenate([b_mu, b_std], axis=1), ((0, 0), (0, pad)))

    return {
        "w1": kaiming(k1, state_dim, HIDDEN).astype(jnp.bfloat16),
        "b1": jnp.zeros((1, HIDDEN), jnp.float32),
        "ln1_g": jnp.ones((1, HIDDEN), jnp.float32),
        "ln1_b": jnp.zeros((1, HIDDEN), jnp.float32),
        "w2": kaiming(k2, HIDDEN, HIDDEN).astype(jnp.bfloat16),
        "b2": jnp.zeros((1, HIDDEN), jnp.float32),
        "ln2_g": jnp.ones((1, HIDDEN), jnp.float32),
        "ln2_b": jnp.zeros((1, HIDDEN), jnp.float32),
        # fused, lane-padded, bf16 head weight used by the kernel
        "w_heads": w_heads.astype(jnp.bfloat16),
        "b_heads": b_heads,
        "action_dim": action_dim,
    }


def policy_forward_ref(x, p):
    """Pure-JAX f32 reference (same bf16-rounded weights, f32 math throughout)."""
    w1 = p["w1"].astype(jnp.float32)
    w2 = p["w2"].astype(jnp.float32)
    wh = p["w_heads"].astype(jnp.float32)
    h = x @ w1 + p["b1"]
    h = _leaky_relu(_layernorm(h, p["ln1_g"], p["ln1_b"]))
    h = h @ w2 + p["b2"]
    h = _leaky_relu(_layernorm(h, p["ln2_g"], p["ln2_b"]))
    head = h @ wh + p["b_heads"]
    a = int(p["action_dim"])
    mu = head[:, :a]
    log_std = jnp.clip(head[:, a:2 * a], LOG_STD_MIN, LOG_STD_MAX)
    return mu, log_std


if __name__ == "__main__":
    key = jax.random.PRNGKey(0)
    k_param, k_x = jax.random.split(key)

    # Ragged batch to exercise the batch grid, padding and slicing.
    B, STATE_DIM, ACTION_DIM = 100, 16, 8
    params = init_params(k_param, STATE_DIM, ACTION_DIM)
    x = jax.random.normal(k_x, (B, STATE_DIM), jnp.float32)

    # Default path: single fat tile (best on single-TC v5e/v6e).
    mu, log_std = jax.block_until_ready(policy_forward(x, params))
    # v7x-style path: >=2 grid steps so both TensorCores participate.
    mu2, log_std2 = jax.block_until_ready(
        policy_forward(x, params, min_grid_steps=2))

    mu_ref, log_std_ref = policy_forward_ref(x, params)
    assert mu.shape == (B, ACTION_DIM) and log_std.shape == (B, ACTION_DIM)
    # bf16 matmul operands -> loosened tolerances vs. the f32 reference.
    assert jnp.allclose(mu, mu_ref, atol=1e-2, rtol=5e-2)
    assert jnp.allclose(log_std, log_std_ref, atol=1e-2, rtol=5e-2)
    # Tiling must not change per-row results.
    assert jnp.allclose(mu, mu2, atol=1e-6) and jnp.allclose(log_std, log_std2, atol=1e-6)
    assert bool(jnp.all(log_std <= LOG_STD_MAX)) and bool(jnp.all(log_std >= LOG_STD_MIN))

    print("KERNEL_OK")
</pallas_src>

<mosaic_0001>
module attributes {stable_mosaic.version = 11 : i64} {
  func.func @policy_kernel(%arg0: i32, %arg1: memref<112x16xf32, #tpu.memory_space<vmem>>, %arg2: memref<16x256xbf16, #tpu.memory_space<vmem>>, %arg3: memref<1x256xf32, #tpu.memory_space<vmem>>, %arg4: memref<1x256xf32, #tpu.memory_space<vmem>>, %arg5: memref<1x256xf32, #tpu.memory_space<vmem>>, %arg6: memref<256x256xbf16, #tpu.memory_space<vmem>>, %arg7: memref<1x256xf32, #tpu.memory_space<vmem>>, %arg8: memref<1x256xf32, #tpu.memory_space<vmem>>, %arg9: memref<1x256xf32, #tpu.memory_space<vmem>>, %arg10: memref<256x128xbf16, #tpu.memory_space<vmem>>, %arg11: memref<1x128xf32, #tpu.memory_space<vmem>>, %arg12: memref<112x128xf32, #tpu.memory_space<vmem>>) attributes {dimension_semantics = [#tpu.dimension_semantics<parallel>], iteration_bounds = array<i64: 1>, scalar_prefetch = 0 : i64, scratch_operands = 0 : i64, tpu.core_type = #tpu.core_type<tc>, window_params = [{transform_indices = @transform_0, window_bounds = array<i64: 112, 16>}, {pipeline_mode = #tpu.pipeline_mode<synchronous>, transform_indices = @transform_1, window_bounds = array<i64: 16, 256>}, {pipeline_mode = #tpu.pipeline_mode<synchronous>, transform_indices = @transform_2, window_bounds = array<i64: 1, 256>}, {pipeline_mode = #tpu.pipeline_mode<synchronous>, transform_indices = @transform_3, window_bounds = array<i64: 1, 256>}, {pipeline_mode = #tpu.pipeline_mode<synchronous>, transform_indices = @transform_4, window_bounds = array<i64: 1, 256>}, {pipeline_mode = #tpu.pipeline_mode<synchronous>, transform_indices = @transform_5, window_bounds = array<i64: 256, 256>}, {pipeline_mode = #tpu.pipeline_mode<synchronous>, transform_indices = @transform_6, window_bounds = array<i64: 1, 256>}, {pipeline_mode = #tpu.pipeline_mode<synchronous>, transform_indices = @transform_7, window_bounds = array<i64: 1, 256>}, {pipeline_mode = #tpu.pipeline_mode<synchronous>, transform_indices = @transform_8, window_bounds = array<i64: 1, 256>}, {pipeline_mode = #tpu.pipeline_mode<synchronous>, transform_indices = @transform_9, window_bounds = array<i64: 256, 128>}, {pipeline_mode = #tpu.pipeline_mode<synchronous>, transform_indices = @transform_10, window_bounds = array<i64: 1, 128>}, {transform_indices = @transform_11, window_bounds = array<i64: 112, 128>}]} {
    %c0 = arith.constant 0 : index
    %c0_0 = arith.constant 0 : index
    %0 = vector.load %arg2[%c0, %c0_0] : memref<16x256xbf16, #tpu.memory_space<vmem>>, vector<16x256xbf16>
    %c0_1 = arith.constant 0 : index
    %c0_2 = arith.constant 0 : index
    %1 = vector.load %arg3[%c0_1, %c0_2] : memref<1x256xf32, #tpu.memory_space<vmem>>, vector<1x256xf32>
    %c0_3 = arith.constant 0 : index
    %c0_4 = arith.constant 0 : index
    %2 = vector.load %arg4[%c0_3, %c0_4] : memref<1x256xf32, #tpu.memory_space<vmem>>, vector<1x256xf32>
    %c0_5 = arith.constant 0 : index
    %c0_6 = arith.constant 0 : index
    %3 = vector.load %arg5[%c0_5, %c0_6] : memref<1x256xf32, #tpu.memory_space<vmem>>, vector<1x256xf32>
    %c0_7 = arith.constant 0 : index
    %c0_8 = arith.constant 0 : index
    %4 = vector.load %arg6[%c0_7, %c0_8] : memref<256x256xbf16, #tpu.memory_space<vmem>>, vector<256x256xbf16>
    %c0_9 = arith.constant 0 : index
    %c0_10 = arith.constant 0 : index
    %5 = vector.load %arg7[%c0_9, %c0_10] : memref<1x256xf32, #tpu.memory_space<vmem>>, vector<1x256xf32>
    %c0_11 = arith.constant 0 : index
    %c0_12 = arith.constant 0 : index
    %6 = vector.load %arg8[%c0_11, %c0_12] : memref<1x256xf32, #tpu.memory_space<vmem>>, vector<1x256xf32>
    %c0_13 = arith.constant 0 : index
    %c0_14 = arith.constant 0 : index
    %7 = vector.load %arg9[%c0_13, %c0_14] : memref<1x256xf32, #tpu.memory_space<vmem>>, vector<1x256xf32>
    %c0_15 = arith.constant 0 : index
    %c0_16 = arith.constant 0 : index
    %8 = vector.load %arg10[%c0_15, %c0_16] : memref<256x128xbf16, #tpu.memory_space<vmem>>, vector<256x128xbf16>
    %c0_17 = arith.constant 0 : index
    %c0_18 = arith.constant 0 : index
    %9 = vector.load %arg11[%c0_17, %c0_18] : memref<1x128xf32, #tpu.memory_space<vmem>>, vector<1x128xf32>
    %c0_19 = arith.constant 0 : index
    %c0_20 = arith.constant 0 : index
    %10 = vector.load %arg1[%c0_19, %c0_20] : memref<112x16xf32, #tpu.memory_space<vmem>>, vector<56x16xf32>
    %11 = arith.truncf %10 : vector<56x16xf32> to vector<56x16xbf16>
    %cst = arith.constant dense<0.000000e+00> : vector<56x256xf32>
    %12 = tpu.matmul %11, %0, %cst {dimension_numbers = #tpu.dot_dimension_numbers<[1], [0], [0], [1], [0, 0, 1, 1], [], []>} : vector<56x16xbf16>, vector<16x256xbf16>, vector<56x256xf32> -> vector<56x256xf32>
    %13 = vector.broadcast %1 : vector<1x256xf32> to vector<56x256xf32>
    %14 = arith.addf %12, %13 : vector<56x256xf32>
    %cst_21 = arith.constant dense<0.000000e+00> : vector<56xf32>
    %15 = vector.multi_reduction <add>, %14, %cst_21 [1] : vector<56x256xf32> to vector<56xf32>
    %16 = vector.shape_cast %15 : vector<56xf32> to vector<56x1xf32>
    %17 = arith.mulf %14, %14 : vector<56x256xf32>
    %cst_22 = arith.constant dense<0.000000e+00> : vector<56xf32>
    %18 = vector.multi_reduction <add>, %17, %cst_22 [1] : vector<56x256xf32> to vector<56xf32>
    %19 = vector.shape_cast %18 : vector<56xf32> to vector<56x1xf32>
    %cst_23 = arith.constant 3.906250e-03 : f32
    %20 = vector.broadcast %cst_23 : f32 to vector<56x1xf32>
    %21 = arith.mulf %16, %20 : vector<56x1xf32>
    %cst_24 = arith.constant 3.906250e-03 : f32
    %22 = vector.broadcast %cst_24 : f32 to vector<56x1xf32>
    %23 = arith.mulf %19, %22 : vector<56x1xf32>
    %24 = arith.mulf %21, %21 : vector<56x1xf32>
    %25 = arith.subf %23, %24 : vector<56x1xf32>
    %26 = vector.broadcast %21 : vector<56x1xf32> to vector<56x256xf32>
    %27 = arith.subf %14, %26 : vector<56x256xf32>
    %cst_25 = arith.constant 9.99999974E-6 : f32
    %28 = vector.broadcast %cst_25 : f32 to vector<56x1xf32>
    %29 = arith.addf %25, %28 : vector<56x1xf32>
    %30 = math.rsqrt %29 : vector<56x1xf32>
    %31 = vector.broadcast %30 : vector<56x1xf32> to vector<56x256xf32>
    %32 = arith.mulf %27, %31 : vector<56x256xf32>
    %33 = vector.broadcast %2 : vector<1x256xf32> to vector<56x256xf32>
    %34 = arith.mulf %32, %33 : vector<56x256xf32>
    %35 = vector.broadcast %3 : vector<1x256xf32> to vector<56x256xf32>
    %36 = arith.addf %34, %35 : vector<56x256xf32>
    %cst_26 = arith.constant 0.000000e+00 : f32
    %37 = vector.broadcast %cst_26 : f32 to vector<56x256xf32>
    %38 = arith.cmpf oge, %36, %37 : vector<56x256xf32>
    %cst_27 = arith.constant 0.00999999977 : f32
    %39 = vector.broadcast %cst_27 : f32 to vector<56x256xf32>
    %40 = arith.mulf %39, %36 : vector<56x256xf32>
    %41 = arith.select %38, %36, %40 : vector<56x256xi1>, vector<56x256xf32>
    %42 = arith.truncf %41 : vector<56x256xf32> to vector<56x256xbf16>
    %cst_28 = arith.constant dense<0.000000e+00> : vector<56x256xf32>
    %43 = tpu.matmul %42, %4, %cst_28 {dimension_numbers = #tpu.dot_dimension_numbers<[1], [0], [0], [1], [0, 0, 1, 1], [], []>} : vector<56x256xbf16>, vector<256x256xbf16>, vector<56x256xf32> -> vector<56x256xf32>
    %44 = vector.broadcast %5 : vector<1x256xf32> to vector<56x256xf32>
    %45 = arith.addf %43, %44 : vector<56x256xf32>
    %cst_29 = arith.constant dense<0.000000e+00> : vector<56xf32>
    %46 = vector.multi_reduction <add>, %45, %cst_29 [1] : vector<56x256xf32> to vector<56xf32>
    %47 = vector.shape_cast %46 : vector<56xf32> to vector<56x1xf32>
    %48 = arith.mulf %45, %45 : vector<56x256xf32>
    %cst_30 = arith.constant dense<0.000000e+00> : vector<56xf32>
    %49 = vector.multi_reduction <add>, %48, %cst_30 [1] : vector<56x256xf32> to vector<56xf32>
    %50 = vector.shape_cast %49 : vector<56xf32> to vector<56x1xf32>
    %cst_31 = arith.constant 3.906250e-03 : f32
    %51 = vector.broadcast %cst_31 : f32 to vector<56x1xf32>
    %52 = arith.mulf %47, %51 : vector<56x1xf32>
    %cst_32 = arith.constant 3.906250e-03 : f32
    %53 = vector.broadcast %cst_32 : f32 to vector<56x1xf32>
    %54 = arith.mulf %50, %53 : vector<56x1xf32>
    %55 = arith.mulf %52, %52 : vector<56x1xf32>
    %56 = arith.subf %54, %55 : vector<56x1xf32>
    %57 = vector.broadcast %52 : vector<56x1xf32> to vector<56x256xf32>
    %58 = arith.subf %45, %57 : vector<56x256xf32>
    %cst_33 = arith.constant 9.99999974E-6 : f32
    %59 = vector.broadcast %cst_33 : f32 to vector<56x1xf32>
    %60 = arith.addf %56, %59 : vector<56x1xf32>
    %61 = math.rsqrt %60 : vector<56x1xf32>
    %62 = vector.broadcast %61 : vector<56x1xf32> to vector<56x256xf32>
    %63 = arith.mulf %58, %62 : vector<56x256xf32>
    %64 = vector.broadcast %6 : vector<1x256xf32> to vector<56x256xf32>
    %65 = arith.mulf %63, %64 : vector<56x256xf32>
    %66 = vector.broadcast %7 : vector<1x256xf32> to vector<56x256xf32>
    %67 = arith.addf %65, %66 : vector<56x256xf32>
    %cst_34 = arith.constant 0.000000e+00 : f32
    %68 = vector.broadcast %cst_34 : f32 to vector<56x256xf32>
    %69 = arith.cmpf oge, %67, %68 : vector<56x256xf32>
    %cst_35 = arith.constant 0.00999999977 : f32
    %70 = vector.broadcast %cst_35 : f32 to vector<56x256xf32>
    %71 = arith.mulf %70, %67 : vector<56x256xf32>
    %72 = arith.select %69, %67, %71 : vector<56x256xi1>, vector<56x256xf32>
    %73 = arith.truncf %72 : vector<56x256xf32> to vector<56x256xbf16>
    %cst_36 = arith.constant dense<0.000000e+00> : vector<56x128xf32>
    %74 = tpu.matmul %73, %8, %cst_36 {dimension_numbers = #tpu.dot_dimension_numbers<[1], [0], [0], [1], [0, 0, 1, 1], [], []>} : vector<56x256xbf16>, vector<256x128xbf16>, vector<56x128xf32> -> vector<56x128xf32>
    %75 = vector.broadcast %9 : vector<1x128xf32> to vector<56x128xf32>
    %76 = arith.addf %74, %75 : vector<56x128xf32>
    %c0_37 = arith.constant 0 : index
    %c0_38 = arith.constant 0 : index
    %77 = vector.load %arg12[%c0_37, %c0_38] : memref<112x128xf32, #tpu.memory_space<vmem>>, vector<56x128xf32>
    tpu.vector_store %arg12[%c0_37, %c0_38], %76 {strides = array<i32>} : memref<112x128xf32, #tpu.memory_space<vmem>>, vector<56x128xf32>,
    %c56 = arith.constant 56 : index
    %c0_39 = arith.constant 0 : index
    %78 = vector.load %arg1[%c56, %c0_39] : memref<112x16xf32, #tpu.memory_space<vmem>>, vector<56x16xf32>
    %79 = arith.truncf %78 : vector<56x16xf32> to vector<56x16xbf16>
    %cst_40 = arith.constant dense<0.000000e+00> : vector<56x256xf32>
    %80 = tpu.matmul %79, %0, %cst_40 {dimension_numbers = #tpu.dot_dimension_numbers<[1], [0], [0], [1], [0, 0, 1, 1], [], []>} : vector<56x16xbf16>, vector<16x256xbf16>, vector<56x256xf32> -> vector<56x256xf32>
    %81 = vector.broadcast %1 : vector<1x256xf32> to vector<56x256xf32>
    %82 = arith.addf %80, %81 : vector<56x256xf32>
    %cst_41 = arith.constant dense<0.000000e+00> : vector<56xf32>
    %83 = vector.multi_reduction <add>, %82, %cst_41 [1] : vector<56x256xf32> to vector<56xf32>
    %84 = vector.shape_cast %83 : vector<56xf32> to vector<56x1xf32>
    %85 = arith.mulf %82, %82 : vector<56x256xf32>
    %cst_42 = arith.constant dense<0.000000e+00> : vector<56xf32>
    %86 = vector.multi_reduction <add>, %85, %cst_42 [1] : vector<56x256xf32> to vector<56xf32>
    %87 = vector.shape_cast %86 : vector<56xf32> to vector<56x1xf32>
    %cst_43 = arith.constant 3.906250e-03 : f32
    %88 = vector.broadcast %cst_43 : f32 to vector<56x1xf32>
    %89 = arith.mulf %84, %88 : vector<56x1xf32>
    %cst_44 = arith.constant 3.906250e-03 : f32
    %90 = vector.broadcast %cst_44 : f32 to vector<56x1xf32>
    %91 = arith.mulf %87, %90 : vector<56x1xf32>
    %92 = arith.mulf %89, %89 : vector<56x1xf32>
    %93 = arith.subf %91, %92 : vector<56x1xf32>
    %94 = vector.broadcast %89 : vector<56x1xf32> to vector<56x256xf32>
    %95 = arith.subf %82, %94 : vector<56x256xf32>
    %cst_45 = arith.constant 9.99999974E-6 : f32
    %96 = vector.broadcast %cst_45 : f32 to vector<56x1xf32>
    %97 = arith.addf %93, %96 : vector<56x1xf32>
    %98 = math.rsqrt %97 : vector<56x1xf32>
    %99 = vector.broadcast %98 : vector<56x1xf32> to vector<56x256xf32>
    %100 = arith.mulf %95, %99 : vector<56x256xf32>
    %101 = vector.broadcast %2 : vector<1x256xf32> to vector<56x256xf32>
    %102 = arith.mulf %100, %101 : vector<56x256xf32>
    %103 = vector.broadcast %3 : vector<1x256xf32> to vector<56x256xf32>
    %104 = arith.addf %102, %103 : vector<56x256xf32>
    %cst_46 = arith.constant 0.000000e+00 : f32
    %105 = vector.broadcast %cst_46 : f32 to vector<56x256xf32>
    %106 = arith.cmpf oge, %104, %105 : vector<56x256xf32>
    %cst_47 = arith.constant 0.00999999977 : f32
    %107 = vector.broadcast %cst_47 : f32 to vector<56x256xf32>
    %108 = arith.mulf %107, %104 : vector<56x256xf32>
    %109 = arith.select %106, %104, %108 : vector<56x256xi1>, vector<56x256xf32>
    %110 = arith.truncf %109 : vector<56x256xf32> to vector<56x256xbf16>
    %cst_48 = arith.constant dense<0.000000e+00> : vector<56x256xf32>
    %111 = tpu.matmul %110, %4, %cst_48 {dimension_numbers = #tpu.dot_dimension_numbers<[1], [0], [0], [1], [0, 0, 1, 1], [], []>} : vector<56x256xbf16>, vector<256x256xbf16>, vector<56x256xf32> -> vector<56x256xf32>
    %112 = vector.broadcast %5 : vector<1x256xf32> to vector<56x256xf32>
    %113 = arith.addf %111, %112 : vector<56x256xf32>
    %cst_49 = arith.constant dense<0.000000e+00> : vector<56xf32>
    %114 = vector.multi_reduction <add>, %113, %cst_49 [1] : vector<56x256xf32> to vector<56xf32>
    %115 = vector.shape_cast %114 : vector<56xf32> to vector<56x1xf32>
    %116 = arith.mulf %113, %113 : vector<56x256xf32>
    %cst_50 = arith.constant dense<0.000000e+00> : vector<56xf32>
    %117 = vector.multi_reduction <add>, %116, %cst_50 [1] : vector<56x256xf32> to vector<56xf32>
    %118 = vector.shape_cast %117 : vector<56xf32> to vector<56x1xf32>
    %cst_51 = arith.constant 3.906250e-03 : f32
    %119 = vector.broadcast %cst_51 : f32 to vector<56x1xf32>
    %120 = arith.mulf %115, %119 : vector<56x1xf32>
    %cst_52 = arith.constant 3.906250e-03 : f32
    %121 = vector.broadcast %cst_52 : f32 to vector<56x1xf32>
    %122 = arith.mulf %118, %121 : vector<56x1xf32>
    %123 = arith.mulf %120, %120 : vector<56x1xf32>
    %124 = arith.subf %122, %123 : vector<56x1xf32>
    %125 = vector.broadcast %120 : vector<56x1xf32> to vector<56x256xf32>
    %126 = arith.subf %113, %125 : vector<56x256xf32>
    %cst_53 = arith.constant 9.99999974E-6 : f32
    %127 = vector.broadcast %cst_53 : f32 to vector<56x1xf32>
    %128 = arith.addf %124, %127 : vector<56x1xf32>
    %129 = math.rsqrt %128 : vector<56x1xf32>
    %130 = vector.broadcast %129 : vector<56x1xf32> to vector<56x256xf32>
    %131 = arith.mulf %126, %130 : vector<56x256xf32>
    %132 = vector.broadcast %6 : vector<1x256xf32> to vector<56x256xf32>
    %133 = arith.mulf %131, %132 : vector<56x256xf32>
    %134 = vector.broadcast %7 : vector<1x256xf32> to vector<56x256xf32>
    %135 = arith.addf %133, %134 : vector<56x256xf32>
    %cst_54 = arith.constant 0.000000e+00 : f32
    %136 = vector.broadcast %cst_54 : f32 to vector<56x256xf32>
    %137 = arith.cmpf oge, %135, %136 : vector<56x256xf32>
    %cst_55 = arith.constant 0.00999999977 : f32
    %138 = vector.broadcast %cst_55 : f32 to vector<56x256xf32>
    %139 = arith.mulf %138, %135 : vector<56x256xf32>
    %140 = arith.select %137, %135, %139 : vector<56x256xi1>, vector<56x256xf32>
    %141 = arith.truncf %140 : vector<56x256xf32> to vector<56x256xbf16>
    %cst_56 = arith.constant dense<0.000000e+00> : vector<56x128xf32>
    %142 = tpu.matmul %141, %8, %cst_56 {dimension_numbers = #tpu.dot_dimension_numbers<[1], [0], [0], [1], [0, 0, 1, 1], [], []>} : vector<56x256xbf16>, vector<256x128xbf16>, vector<56x128xf32> -> vector<56x128xf32>
    %143 = vector.broadcast %9 : vector<1x128xf32> to vector<56x128xf32>
    %144 = arith.addf %142, %143 : vector<56x128xf32>
    %c56_57 = arith.constant 56 : index
    %c0_58 = arith.constant 0 : index
    %145 = vector.load %arg12[%c56_57, %c0_58] : memref<112x128xf32, #tpu.memory_space<vmem>>, vector<56x128xf32>
    tpu.vector_store %arg12[%c56_57, %c0_58], %144 {strides = array<i32>} : memref<112x128xf32, #tpu.memory_space<vmem>>, vector<56x128xf32>,
    return
  }
  func.func @transform_0(%arg0: i32) -> (i32, i32) {
    %c0_i32 = arith.constant 0 : i32
    %c0_i32_0 = arith.constant 0 : i32
    return %arg0, %c0_i32 : i32, i32
  }
  func.func @transform_1(%arg0: i32) -> (i32, i32) {
    %c0_i32 = arith.constant 0 : i32
    %c0_i32_0 = arith.constant 0 : i32
    %c0_i32_1 = arith.constant 0 : i32
    return %c0_i32, %c0_i32_0 : i32, i32
  }
  func.func @transform_2(%arg0: i32) -> (i32, i32) {
    %c0_i32 = arith.constant 0 : i32
    %c0_i32_0 = arith.constant 0 : i32
    %c0_i32_1 = arith.constant 0 : i32
    return %c0_i32, %c0_i32_0 : i32, i32
  }
  func.func @transform_3(%arg0: i32) -> (i32, i32) {
    %c0_i32 = arith.constant 0 : i32
    %c0_i32_0 = arith.constant 0 : i32
    %c0_i32_1 = arith.constant 0 : i32
    return %c0_i32, %c0_i32_0 : i32, i32
  }
  func.func @transform_4(%arg0: i32) -> (i32, i32) {
    %c0_i32 = arith.constant 0 : i32
    %c0_i32_0 = arith.constant 0 : i32
    %c0_i32_1 = arith.constant 0 : i32
    return %c0_i32, %c0_i32_0 : i32, i32
  }
  func.func @transform_5(%arg0: i32) -> (i32, i32) {
    %c0_i32 = arith.constant 0 : i32
    %c0_i32_0 = arith.constant 0 : i32
    %c0_i32_1 = arith.constant 0 : i32
    return %c0_i32, %c0_i32_0 : i32, i32
  }
  func.func @transform_6(%arg0: i32) -> (i32, i32) {
    %c0_i32 = arith.constant 0 : i32
    %c0_i32_0 = arith.constant 0 : i32
    %c0_i32_1 = arith.constant 0 : i32
    return %c0_i32, %c0_i32_0 : i32, i32
  }
  func.func @transform_7(%arg0: i32) -> (i32, i32) {
    %c0_i32 = arith.constant 0 : i32
    %c0_i32_0 = arith.constant 0 : i32
    %c0_i32_1 = arith.constant 0 : i32
    return %c0_i32, %c0_i32_0 : i32, i32
  }
  func.func @transform_8(%arg0: i32) -> (i32, i32) {
    %c0_i32 = arith.constant 0 : i32
    %c0_i32_0 = arith.constant 0 : i32
    %c0_i32_1 = arith.constant 0 : i32
    return %c0_i32, %c0_i32_0 : i32, i32
  }
  func.func @transform_9(%arg0: i32) -> (i32, i32) {
    %c0_i32 = arith.constant 0 : i32
    %c0_i32_0 = arith.constant 0 : i32
    %c0_i32_1 = arith.constant 0 : i32
    return %c0_i32, %c0_i32_0 : i32, i32
  }
  func.func @transform_10(%arg0: i32) -> (i32, i32) {
    %c0_i32 = arith.constant 0 : i32
    %c0_i32_0 = arith.constant 0 : i32
    %c0_i32_1 = arith.constant 0 : i32
    return %c0_i32, %c0_i32_0 : i32, i32
  }
  func.func @transform_11(%arg0: i32) -> (i32, i32) {
    %c0_i32 = arith.constant 0 : i32
    %c0_i32_0 = arith.constant 0 : i32
    return %arg0, %c0_i32 : i32, i32
  }
}

</mosaic_0001>

<llo_original>
// kernel: tpu_custom_call.1
$region0: #{tpu_custom_call.1}
  #allocation0 [shape = 'u32[]', space=smem, size = 0x4, offset = 0x4, fixed_abs, tag = 'smem constant byte address 0x4 - core index']
  #allocation1 [shape = 'u32[144,128]{1,0:T(1,128)}', space=vmem, size = 0x12000, scoped, tag = 'internal scratch']
  %s0 = inlined_call_operand.vmem [shape: f32[112,16], index: 0, kind: input, shape index: {}]
  %s1 = inlined_call_operand.vmem [shape: bf16[16,256], index: 1, kind: input, shape index: {}]
  %s2 = inlined_call_operand.vmem [shape: f32[1,256], index: 2, kind: input, shape index: {}]
  %s3 = inlined_call_operand.vmem [shape: f32[1,256], index: 3, kind: input, shape index: {}]
  %s4 = inlined_call_operand.vmem [shape: f32[1,256], index: 4, kind: input, shape index: {}]
  %s5 = inlined_call_operand.hbm [shape: bf16[256,256], index: 5, kind: input, shape index: {}]
  %s6 = inlined_call_operand.vmem [shape: f32[1,256], index: 6, kind: input, shape index: {}]
  %s7 = inlined_call_operand.vmem [shape: f32[1,256], index: 7, kind: input, shape index: {}]
  %s8 = inlined_call_operand.vmem [shape: f32[1,256], index: 8, kind: input, shape index: {}]
  %s9 = inlined_call_operand.vmem [shape: bf16[256,128], index: 9, kind: input, shape index: {}]
  %s10 = inlined_call_operand.vmem [shape: f32[1,128], index: 10, kind: input, shape index: {}]
  %s11 = inlined_call_operand.hbm [shape: f32[112,128], index: 11, kind: output, shape index: {}]
  %s12 = sld [smem:[#allocation0]]
  $region58: #{tpu_custom_call.1} parent=0
    _
  %s14 = ssub.s32 1, %s12
  %s15 = scalar_select 0, %s14, %s12
  $region1: #{tpu_custom_call.1} parent=0
    #allocation2 [shape = 'u8[131072]{0}', space=vmem, size = 0x20000, scoped, tag = 'input window, operand 5, single buffered']
    #allocation3 [shape = 's32[1]{0}', space=sflag, size = 0x4, scoped, tag = 'scoped memory for tpu_custom_call.1']
    #allocation4 [shape = 's32[1]{0}', space=sflag, size = 0x4, scoped, tag = 'scoped memory for tpu_custom_call.1']
    #allocation5 [shape = 'u8[57344]{0}', space=vmem, size = 0xe000, scoped, tag = 'output window, operand 0, single buffered']
    %16 = vsyncpa [#allocation3], 0
    %17 = vsyncpa [#allocation4], 0
    // Predicated region
    $region2: #{tpu_custom_call.1} parent=1 // pred_check
      _
    $region3: #{tpu_custom_call.1} parent=1 // pred_check_branch
      %19 = sbr.rel (0) target = $region5
    $region4: #{tpu_custom_call.1} parent=1 // pred_region
      _
    $region5: #{tpu_custom_call.1} parent=1 // pred_fallthru
      _
    // Predicated region
    $region6: #{tpu_custom_call.1} parent=1 // pred_check
      _
    $region7: #{tpu_custom_call.1} parent=1 // pred_check_branch
      %21 = sbr.rel (0) target = $region9
    $region8: #{tpu_custom_call.1} parent=1 // pred_region
      _
    $region9: #{tpu_custom_call.1} parent=1 // pred_fallthru
      _
    // Predicated region
    $region10: #{tpu_custom_call.1} parent=1 // pred_check
      _
    $region11: #{tpu_custom_call.1} parent=1 // pred_check_branch
      %23 = sbr.rel (0) target = $region13
    $region12: #{tpu_custom_call.1} parent=1 // pred_region
      _
    $region13: #{tpu_custom_call.1} parent=1 // pred_fallthru
      _
    // Predicated region
    $region14: #{tpu_custom_call.1} parent=1 // pred_check
      _
    $region15: #{tpu_custom_call.1} parent=1 // pred_check_branch
      %25 = sbr.rel (0) target = $region17
    $region16: #{tpu_custom_call.1} parent=1 // pred_region
      _
    $region17: #{tpu_custom_call.1} parent=1 // pred_fallthru
      _
    // Predicated region
    $region18: #{tpu_custom_call.1} parent=1 // pred_check
      _
    $region19: #{tpu_custom_call.1} parent=1 // pred_check_branch
      %27 = sbr.rel (0) target = $region21
    $region20: #{tpu_custom_call.1} parent=1 // pred_region
      _
    $region21: #{tpu_custom_call.1} parent=1 // pred_fallthru
      _
    // Predicated region
    $region22: #{tpu_custom_call.1} parent=1 // pred_check
      _
    $region23: #{tpu_custom_call.1} parent=1 // pred_check_branch
      %29 = sbr.rel (0) target = $region25
    $region24: #{tpu_custom_call.1} parent=1 // pred_region
      %s31 = ssub.s32 4096, 4096
      %32 = vsyncadd [#allocation3], %s31
      %s33 = sshll.u32 [#allocation2], 4
      %s34 = int_to_ptr.vmem [resolvable:$true] %s33
      %39 = dma.hbm_to_vmem [thread:$0]  %s5, 4096, %s34, [#allocation3], 128, 128, 8
    $region25: #{tpu_custom_call.1} parent=1 // pred_fallthru
      _
    // Predicated region
    $region26: #{tpu_custom_call.1} parent=1 // pred_check
      _
    $region27: #{tpu_custom_call.1} parent=1 // pred_check_branch
      %41 = sbr.rel (0) target = $region29
    $region28: #{tpu_custom_call.1} parent=1 // pred_region
      _
    $region29: #{tpu_custom_call.1} parent=1 // pred_fallthru
      _
    // Predicated region
    $region30: #{tpu_custom_call.1} parent=1 // pred_check
      _
    $region31: #{tpu_custom_call.1} parent=1 // pred_check_branch
      %43 = sbr.rel (0) target = $region33
    $region32: #{tpu_custom_call.1} parent=1 // pred_region
      _
    $region33: #{tpu_custom_call.1} parent=1 // pred_fallthru
      _
    // Predicated region
    $region34: #{tpu_custom_call.1} parent=1 // pred_check
      _
    $region35: #{tpu_custom_call.1} parent=1 // pred_check_branch
      %45 = sbr.rel (0) target = $region37
    $region36: #{tpu_custom_call.1} parent=1 // pred_region
      _
    $region37: #{tpu_custom_call.1} parent=1 // pred_fallthru
      _
    // Predicated region
    $region38: #{tpu_custom_call.1} parent=1 // pred_check
      _
    $region39: #{tpu_custom_call.1} parent=1 // pred_check_branch
      %47 = sbr.rel (0) target = $region41
    $region40: #{tpu_custom_call.1} parent=1 // pred_region
      _
    $region41: #{tpu_custom_call.1} parent=1 // pred_fallthru
      _
    // Predicated region
    $region42: #{tpu_custom_call.1} parent=1 // pred_check
      _
    $region43: #{tpu_custom_call.1} parent=1 // pred_check_branch
      %49 = sbr.rel (0) target = $region45
    $region44: #{tpu_custom_call.1} parent=1 // pred_region
      _
    $region45: #{tpu_custom_call.1} parent=1 // pred_fallthru
      _
    // Predicated region
    $region46: #{tpu_custom_call.1} parent=1 // pred_check
      _
    $region47: #{tpu_custom_call.1} parent=1 // pred_check_branch
      %51 = sbr.rel (0) target = $region49
    $region48: #{tpu_custom_call.1} parent=1 // pred_region
      %52 = dma.done [#allocation3], 4096
    $region49: #{tpu_custom_call.1} parent=1 // pred_fallthru
      _
    %v54 = vld [vmem:[%s1] sm:$0xff]
    %v55 = vld [vmem:[%s1 + $0x8] sm:$0xff]
    %v56 = vld [vmem:[%s2] sm:$0x3]
    %v57 = vld [vmem:[%s3] sm:$0x3]
    %v58 = vld [vmem:[%s4] sm:$0x3]
    %v59 = vld [vmem:[#allocation2] sm:$0xff]
    %v60 = vld [vmem:[#allocation2 + $0x8] sm:$0xff]
    %v61 = vld [vmem:[#allocation2 + $0x10] sm:$0xff]
    %v62 = vld [vmem:[#allocation2 + $0x18] sm:$0xff]
    %v63 = vld [vmem:[#allocation2 + $0x20] sm:$0xff]
    %v64 = vld [vmem:[#allocation2 + $0x28] sm:$0xff]
    %v65 = vld [vmem:[#allocation2 + $0x30] sm:$0xff]
    %v66 = vld [vmem:[#allocation2 + $0x38] sm:$0xff]
    %v67 = vld [vmem:[#allocation2 + $0x40] sm:$0xff]
    %v68 = vld [vmem:[#allocation2 + $0x48] sm:$0xff]
    %v69 = vld [vmem:[#allocation2 + $0x50] sm:$0xff]
    %v70 = vld [vmem:[#allocation2 + $0x58] sm:$0xff]
    %v71 = vld [vmem:[#allocation2 + $0x60] sm:$0xff]
    %v72 = vld [vmem:[#allocation2 + $0x68] sm:$0xff]
    %v73 = vld [vmem:[#allocation2 + $0x70] sm:$0xff]
    %v74 = vld [vmem:[#allocation2 + $0x78] sm:$0xff]
    %v75 = vld [vmem:[#allocation2 + $0x80] sm:$0xff]
    %v76 = vld [vmem:[#allocation2 + $0x88] sm:$0xff]
    %v77 = vld [vmem:[#allocation2 + $0x90] sm:$0xff]
    %v78 = vld [vmem:[#allocation2 + $0x98] sm:$0xff]
    %v79 = vld [vmem:[#allocation2 + $0xa0] sm:$0xff]
    %v80 = vld [vmem:[#allocation2 + $0xa8] sm:$0xff]
    %v81 = vld [vmem:[#allocation2 + $0xb0] sm:$0xff]
    %v82 = vld [vmem:[#allocation2 + $0xb8] sm:$0xff]
    %v83 = vld [vmem:[#allocation2 + $0xc0] sm:$0xff]
    %v84 = vld [vmem:[#allocation2 + $0xc8] sm:$0xff]
    %v85 = vld [vmem:[#allocation2 + $0xd0] sm:$0xff]
    %v86 = vld [vmem:[#allocation2 + $0xd8] sm:$0xff]
    %v87 = vld [vmem:[#allocation2 + $0xe0] sm:$0xff]
    %v88 = vld [vmem:[#allocation2 + $0xe8] sm:$0xff]
    %v89 = vld [vmem:[#allocation2 + $0xf0] sm:$0xff]
    %v90 = vld [vmem:[#allocation2 + $0xf8] sm:$0xff]
    %v91 = vld [vmem:[%s6] sm:$0x3]
    %v92 = vld [vmem:[%s7] sm:$0x3]
    %v93 = vld [vmem:[%s8] sm:$0x3]
    %v94 = vld [vmem:[%s9] sm:$0xf]
    %v95 = vld [vmem:[%s9 + $0x4] sm:$0xf]
    %v96 = vld [vmem:[%s9 + $0x8] sm:$0xf]
    %v97 = vld [vmem:[%s9 + $0xc] sm:$0xf]
    %v98 = vld [vmem:[%s9 + $0x10] sm:$0xf]
    %v99 = vld [vmem:[%s9 + $0x14] sm:$0xf]
    %v100 = vld [vmem:[%s9 + $0x18] sm:$0xf]
    %v101 = vld [vmem:[%s9 + $0x1c] sm:$0xf]
    %v102 = vld [vmem:[%s9 + $0x20] sm:$0xf]
    %v103 = vld [vmem:[%s9 + $0x24] sm:$0xf]
    %v104 = vld [vmem:[%s9 + $0x28] sm:$0xf]
    %v105 = vld [vmem:[%s9 + $0x2c] sm:$0xf]
    %v106 = vld [vmem:[%s9 + $0x30] sm:$0xf]
    %v107 = vld [vmem:[%s9 + $0x34] sm:$0xf]
    %v108 = vld [vmem:[%s9 + $0x38] sm:$0xf]
    %v109 = vld [vmem:[%s9 + $0x3c] sm:$0xf]
    %v110 = vld [vmem:[%s9 + $0x40] sm:$0xf]
    %v111 = vld [vmem:[%s9 + $0x44] sm:$0xf]
    %v112 = vld [vmem:[%s9 + $0x48] sm:$0xf]
    %v113 = vld [vmem:[%s9 + $0x4c] sm:$0xf]
    %v114 = vld [vmem:[%s9 + $0x50] sm:$0xf]
    %v115 = vld [vmem:[%s9 + $0x54] sm:$0xf]
    %v116 = vld [vmem:[%s9 + $0x58] sm:$0xf]
    %v117 = vld [vmem:[%s9 + $0x5c] sm:$0xf]
    %v118 = vld [vmem:[%s9 + $0x60] sm:$0xf]
    %v119 = vld [vmem:[%s9 + $0x64] sm:$0xf]
    %v120 = vld [vmem:[%s9 + $0x68] sm:$0xf]
    %v121 = vld [vmem:[%s9 + $0x6c] sm:$0xf]
    %v122 = vld [vmem:[%s9 + $0x70] sm:$0xf]
    %v123 = vld [vmem:[%s9 + $0x74] sm:$0xf]
    %v124 = vld [vmem:[%s9 + $0x78] sm:$0xf]
    %v125 = vld [vmem:[%s9 + $0x7c] sm:$0xf]
    %v126 = vld [vmem:[%s10] sm:$0x1]
    %v127 = vld [vmem:[%s0] sm:$0xff]
    %v128 = vld [vmem:[%s0 + $0x8] sm:$0xff]
    %v129 = vld [vmem:[%s0 + $0x10] sm:$0xff]
    %v130 = vld [vmem:[%s0 + $0x18] sm:$0xff]
    %v131 = vld [vmem:[%s0 + $0x20] sm:$0xff]
    %v132 = vld [vmem:[%s0 + $0x28] sm:$0xff]
    %v133 = vld [vmem:[%s0 + $0x30] sm:$0xff]
    %v134 = vpack.c.bf16 %v128, %v127
    %v135 = vpack.c.bf16 %v130, %v129
    %v136 = vpack.c.bf16 %v132, %v131
    %v137 = vpack.c.bf16 %v133, %v133
    %v139 = vlaneseq
    %v140 = vshrl.u32 %v139, 7
    %v141 = vsub.s32 0, %v140
    %v142 = vrot.slane %v56, %v141
    %v143 = vlaneseq
    %v144 = vshrl.u32 %v143, 7
    %v145 = vsub.s32 1, %v144
    %v146 = vrot.slane %v56, %v145
    %v151 = vunpack.c.l.b16 %v54
    %v152 = vunpack.c.h.b16 %v54
    %v153 = vunpack.c.l.b16 %v55
    %v154 = vunpack.c.h.b16 %v55
    %v155 = vpack.c.b16 %v153, %v151
    %v156 = vpack.c.b16 %v154, %v152
    %vm159 = vcmask 130048
    %v161 = vsel %vm159, %v134, 0
    %v164 = vsel %vm159, %v135, 0
    %v167 = vsel %vm159, %v136, 0
    %v170 = vsel %vm159, %v137, 0
    %172 = vmatprep.subr.bf16.mxu0 %v156
    %173 = vmatpush1.bf16.msra.mxu0 %v155
    %174 = vmatprep.subr.bf16.mxu0 0
    %175 = vmatpush1.bf16.msra.mxu0 0
    %176 = vmatprep.subr.bf16.mxu0 0
    %177 = vmatpush1.bf16.msra.mxu0 0
    %178 = vmatprep.subr.bf16.mxu0 0
    %179 = vmatpush1.bf16.msra.mxu0 0
    %180 = vmatprep.subr.bf16.mxu0 0
    %181 = vmatpush1.bf16.msra.mxu0 0
    %182 = vmatprep.subr.bf16.mxu0 0
    %183 = vmatpush1.bf16.msra.mxu0 0
    %184 = vmatprep.subr.bf16.mxu0 0
    %185 = vmatpush1.bf16.msra.mxu0 0
    %186 = vmatprep.subr.bf16.mxu0 0
    %187 = vmatpush1.bf16.msra.mxu0 0
    %188 = vmatprep.subr.bf16.mxu0 0
    %189 = vmatpush1.bf16.msra.mxu0 0
    %190 = vmatprep.subr.bf16.mxu0 0
    %191 = vmatpush1.bf16.msra.mxu0 0
    %192 = vmatprep.subr.bf16.mxu0 0
    %193 = vmatpush1.bf16.msra.mxu0 0
    %194 = vmatprep.subr.bf16.mxu0 0
    %195 = vmatpush1.bf16.msra.mxu0 0
    %196 = vmatprep.subr.bf16.mxu0 0
    %197 = vmatpush1.bf16.msra.mxu0 0
    %198 = vmatprep.subr.bf16.mxu0 0
    %199 = vmatpush1.bf16.msra.mxu0 0
    %200 = vmatprep.subr.bf16.mxu0 0
    %201 = vmatpush1.bf16.msra.mxu0 0
    %202 = vmatprep.subr.bf16.mxu0 0
    %203 = vmatpush1.bf16.msra.mxu0 0
    %204 = vmatprep.mubr.bf16.mxu0 0
    %205 = vmatmul.mubr.bf16.gmra.mrb[0].mxu0 %v161
    %v206 = vpop.f32.mrb[0].mxu0
    %v207 = vadd.f32 %v142, %v206
    %v208 = vpop.f32.mrb[0].mxu0
    %v209 = vadd.f32 %v146, %v208
    %v210 = vpop.f32.mrb[0].mxu0
    %v211 = vadd.f32 %v142, %v210
    %v212 = vpop.f32.mrb[0].mxu0
    %v213 = vadd.f32 %v146, %v212
    %214 = vmatprep.mubr.bf16.mxu0 0
    %215 = vmatmul.mubr.bf16.gmra.mrb[0].mxu0 %v164
    %v216 = vpop.f32.mrb[0].mxu0
    %v217 = vadd.f32 %v142, %v216
    %v218 = vpop.f32.mrb[0].mxu0
    %v219 = vadd.f32 %v146, %v218
    %v220 = vpop.f32.mrb[0].mxu0
    %v221 = vadd.f32 %v142, %v220
    %v222 = vpop.f32.mrb[0].mxu0
    %v223 = vadd.f32 %v146, %v222
    %224 = vmatprep.mubr.bf16.mxu0 0
    %225 = vmatmul.mubr.bf16.gmra.mrb[0].mxu0 %v167
    %v226 = vpop.f32.mrb[0].mxu0
    %v227 = vadd.f32 %v142, %v226
    %v228 = vpop.f32.mrb[0].mxu0
    %v229 = vadd.f32 %v146, %v228
    %v230 = vpop.f32.mrb[0].mxu0
    %v231 = vadd.f32 %v142, %v230
    %v232 = vpop.f32.mrb[0].mxu0
    %v233 = vadd.f32 %v146, %v232
    %234 = vmatprep.mubr.bf16.mxu0 0
    %235 = vmatmul.mubr.bf16.gmra.mrb[0].mxu0 %v170
    %v236 = vpop.f32.mrb[0].mxu0
    %v237 = vadd.f32 %v142, %v236
    %v238 = vpop.f32.mrb[0].mxu0
    %v239 = vadd.f32 %v146, %v238
    %v240 = vpop.f32.mrb[0].mxu0
    %v241 = vpop.f32.mrb[0].mxu0
    %242 = vdwg.mxu0
    %v243 = vadd.f32 %v207, %v209
    %244 = vadd.xlane.f32.xlu0 %v243
    %v245 = vpop.xlane.xlu0 %244
    %v246 = vadd.f32 %v211, %v213
    %247 = vadd.xlane.f32.xlu0 %v246
    %v248 = vpop.xlane.xlu0 %247
    %v249 = vadd.f32 %v217, %v219
    %250 = vadd.xlane.f32.xlu0 %v249
    %v251 = vpop.xlane.xlu0 %250
    %v252 = vadd.f32 %v221, %v223
    %253 = vadd.xlane.f32.xlu0 %v252
    %v254 = vpop.xlane.xlu0 %253
    %v255 = vadd.f32 %v227, %v229
    %256 = vadd.xlane.f32.xlu0 %v255
    %v257 = vpop.xlane.xlu0 %256
    %v258 = vadd.f32 %v231, %v233
    %259 = vadd.xlane.f32.xlu0 %v258
    %v260 = vpop.xlane.xlu0 %259
    %v261 = vadd.f32 %v237, %v239
    %262 = vadd.xlane.f32.xlu0 %v261
    %v263 = vpop.xlane.xlu0 %262
    %v264 = vmul.f32 %v207, %v207
    %v265 = vmul.f32 %v209, %v209
    %v266 = vmul.f32 %v211, %v211
    %v267 = vmul.f32 %v213, %v213
    %v268 = vmul.f32 %v217, %v217
    %v269 = vmul.f32 %v219, %v219
    %v270 = vmul.f32 %v221, %v221
    %v271 = vmul.f32 %v223, %v223
    %v272 = vmul.f32 %v227, %v227
    %v273 = vmul.f32 %v229, %v229
    %v274 = vmul.f32 %v231, %v231
    %v275 = vmul.f32 %v233, %v233
    %v276 = vmul.f32 %v237, %v237
    %v277 = vmul.f32 %v239, %v239
    %v278 = vadd.f32 %v264, %v265
    %279 = vadd.xlane.f32.xlu0 %v278
    %v280 = vpop.xlane.xlu0 %279
    %v281 = vadd.f32 %v266, %v267
    %282 = vadd.xlane.f32.xlu0 %v281
    %v283 = vpop.xlane.xlu0 %282
    %v284 = vadd.f32 %v268, %v269
    %285 = vadd.xlane.f32.xlu0 %v284
    %v286 = vpop.xlane.xlu0 %285
    %v287 = vadd.f32 %v270, %v271
    %288 = vadd.xlane.f32.xlu0 %v287
    %v289 = vpop.xlane.xlu0 %288
    %v290 = vadd.f32 %v272, %v273
    %291 = vadd.xlane.f32.xlu0 %v290
    %v292 = vpop.xlane.xlu0 %291
    %v293 = vadd.f32 %v274, %v275
    %294 = vadd.xlane.f32.xlu0 %v293
    %v295 = vpop.xlane.xlu0 %294
    %v296 = vadd.f32 %v276, %v277
    %297 = vadd.xlane.f32.xlu0 %v296
    %v298 = vpop.xlane.xlu0 %297
    %v299 = vmul.f32 %v245, 0.00390625
    %v300 = vmul.f32 %v248, 0.00390625
    %v301 = vmul.f32 %v251, 0.00390625
    %v302 = vmul.f32 %v254, 0.00390625
    %v303 = vmul.f32 %v257, 0.00390625
    %v304 = vmul.f32 %v260, 0.00390625
    %v305 = vmul.f32 %v263, 0.00390625
    %v306 = vmul.f32 %v280, 0.00390625
    %v307 = vmul.f32 %v283, 0.00390625
    %v308 = vmul.f32 %v286, 0.00390625
    %v309 = vmul.f32 %v289, 0.00390625
    %v310 = vmul.f32 %v292, 0.00390625
    %v311 = vmul.f32 %v295, 0.00390625
    %v312 = vmul.f32 %v298, 0.00390625
    %v313 = vmul.f32 %v299, %v299
    %v314 = vmul.f32 %v300, %v300
    %v315 = vmul.f32 %v301, %v301
    %v316 = vmul.f32 %v302, %v302
    %v317 = vmul.f32 %v303, %v303
    %v318 = vmul.f32 %v304, %v304
    %v319 = vmul.f32 %v305, %v305
    %v320 = vsub.f32 %v306, %v313
    %v321 = vsub.f32 %v307, %v314
    %v322 = vsub.f32 %v308, %v315
    %v323 = vsub.f32 %v309, %v316
    %v324 = vsub.f32 %v310, %v317
    %v325 = vsub.f32 %v311, %v318
    %v326 = vsub.f32 %v312, %v319
    %v327 = vsub.f32 %v207, %v299
    %v328 = vsub.f32 %v209, %v299
    %v329 = vsub.f32 %v211, %v300
    %v330 = vsub.f32 %v213, %v300
    %v331 = vsub.f32 %v217, %v301
    %v332 = vsub.f32 %v219, %v301
    %v333 = vsub.f32 %v221, %v302
    %v334 = vsub.f32 %v223, %v302
    %v335 = vsub.f32 %v227, %v303
    %v336 = vsub.f32 %v229, %v303
    %v337 = vsub.f32 %v231, %v304
    %v338 = vsub.f32 %v233, %v304
    %v339 = vsub.f32 %v237, %v305
    %v340 = vsub.f32 %v239, %v305
    %v341 = vadd.f32 %v320, 1e-05
    %v342 = vadd.f32 %v321, 1e-05
    %v343 = vadd.f32 %v322, 1e-05
    %v344 = vadd.f32 %v323, 1e-05
    %v345 = vadd.f32 %v324, 1e-05
    %v346 = vadd.f32 %v325, 1e-05
    %v347 = vadd.f32 %v326, 1e-05
    %v348 = vrsqrt.pop %v341
    %v349 = vrsqrt.pop %v342
    %v350 = vrsqrt.pop %v343
    %v351 = vrsqrt.pop %v344
    %v352 = vrsqrt.pop %v345
    %v353 = vrsqrt.pop %v346
    %v354 = vrsqrt.pop %v347
    %v355 = vmul.f32 %v327, %v348
    %v356 = vmul.f32 %v328, %v348
    %v357 = vmul.f32 %v329, %v349
    %v358 = vmul.f32 %v330, %v349
    %v359 = vmul.f32 %v331, %v350
    %v360 = vmul.f32 %v332, %v350
    %v361 = vmul.f32 %v333, %v351
    %v362 = vmul.f32 %v334, %v351
    %v363 = vmul.f32 %v335, %v352
    %v364 = vmul.f32 %v336, %v352
    %v365 = vmul.f32 %v337, %v353
    %v366 = vmul.f32 %v338, %v353
    %v367 = vmul.f32 %v339, %v354
    %v368 = vmul.f32 %v340, %v354
    %v370 = vlaneseq
    %v371 = vshrl.u32 %v370, 7
    %v372 = vsub.s32 0, %v371
    %v373 = vrot.slane %v57, %v372
    %v374 = vlaneseq
    %v375 = vshrl.u32 %v374, 7
    %v376 = vsub.s32 1, %v375
    %v377 = vrot.slane %v57, %v376
    %v380 = vmul.f32 %v355, %v373
    %v381 = vmul.f32 %v356, %v377
    %v382 = vmul.f32 %v357, %v373
    %v383 = vmul.f32 %v358, %v377
    %v384 = vmul.f32 %v359, %v373
    %v385 = vmul.f32 %v360, %v377
    %v386 = vmul.f32 %v361, %v373
    %v387 = vmul.f32 %v362, %v377
    %v388 = vmul.f32 %v363, %v373
    %v389 = vmul.f32 %v364, %v377
    %v390 = vmul.f32 %v365, %v373
    %v391 = vmul.f32 %v366, %v377
    %v392 = vmul.f32 %v367, %v373
    %v393 = vmul.f32 %v368, %v377
    %v395 = vlaneseq
    %v396 = vshrl.u32 %v395, 7
    %v397 = vsub.s32 0, %v396
    %v398 = vrot.slane %v58, %v397
    %v399 = vlaneseq
    %v400 = vshrl.u32 %v399, 7
    %v401 = vsub.s32 1, %v400
    %v402 = vrot.slane %v58, %v401
    %v405 = vadd.f32 %v380, %v398
    %v406 = vadd.f32 %v381, %v402
    %v407 = vadd.f32 %v382, %v398
    %v408 = vadd.f32 %v383, %v402
    %v409 = vadd.f32 %v384, %v398
    %v410 = vadd.f32 %v385, %v402
    %v411 = vadd.f32 %v386, %v398
    %v412 = vadd.f32 %v387, %v402
    %v413 = vadd.f32 %v388, %v398
    %v414 = vadd.f32 %v389, %v402
    %v415 = vadd.f32 %v390, %v398
    %v416 = vadd.f32 %v391, %v402
    %v417 = vadd.f32 %v392, %v398
    %v418 = vadd.f32 %v393, %v402
    %vm419 = vcmp.ge.f32.partialorder %v405, 0.0
    %vm420 = vcmp.ge.f32.partialorder %v406, 0.0
    %vm421 = vcmp.ge.f32.partialorder %v407, 0.0
    %vm422 = vcmp.ge.f32.partialorder %v408, 0.0
    %vm423 = vcmp.ge.f32.partialorder %v409, 0.0
    %vm424 = vcmp.ge.f32.partialorder %v410, 0.0
    %vm425 = vcmp.ge.f32.partialorder %v411, 0.0
    %vm426 = vcmp.ge.f32.partialorder %v412, 0.0
    %vm427 = vcmp.ge.f32.partialorder %v413, 0.0
    %vm428 = vcmp.ge.f32.partialorder %v414, 0.0
    %vm429 = vcmp.ge.f32.partialorder %v415, 0.0
    %vm430 = vcmp.ge.f32.partialorder %v416, 0.0
    %vm431 = vcmp.ge.f32.partialorder %v417, 0.0
    %vm432 = vcmp.ge.f32.partialorder %v418, 0.0
    %v433 = vmul.f32 %v405, 0.01
    %v434 = vmul.f32 %v406, 0.01
    %v435 = vmul.f32 %v407, 0.01
    %v436 = vmul.f32 %v408, 0.01
    %v437 = vmul.f32 %v409, 0.01
    %v438 = vmul.f32 %v410, 0.01
    %v439 = vmul.f32 %v411, 0.01
    %v440 = vmul.f32 %v412, 0.01
    %v441 = vmul.f32 %v413, 0.01
    %v442 = vmul.f32 %v414, 0.01
    %v443 = vmul.f32 %v415, 0.01
    %v444 = vmul.f32 %v416, 0.01
    %v445 = vmul.f32 %v417, 0.01
    %v446 = vmul.f32 %v418, 0.01
    %v447 = vsel %vm419, %v405, %v433
    %v448 = vsel %vm420, %v406, %v434
    %v449 = vsel %vm421, %v407, %v435
    %v450 = vsel %vm422, %v408, %v436
    %v451 = vsel %vm423, %v409, %v437
    %v452 = vsel %vm424, %v410, %v438
    %v453 = vsel %vm425, %v411, %v439
    %v454 = vsel %vm426, %v412, %v440
    %v455 = vsel %vm427, %v413, %v441
    %v456 = vsel %vm428, %v414, %v442
    %v457 = vsel %vm429, %v415, %v443
    %v458 = vsel %vm430, %v416, %v444
    %v459 = vsel %vm431, %v417, %v445
    %v460 = vsel %vm432, %v418, %v446
    %v461 = vpack.c.bf16 %v449, %v447
    %v462 = vpack.c.bf16 %v450, %v448
    %v463 = vpack.c.bf16 %v453, %v451
    %v464 = vpack.c.bf16 %v454, %v452
    %v465 = vpack.c.bf16 %v457, %v455
    %v466 = vpack.c.bf16 %v458, %v456
    %v467 = vpack.c.bf16 %v459, %v459
    %v468 = vpack.c.bf16 %v460, %v460
    %v470 = vlaneseq
    %v471 = vshrl.u32 %v470, 7
    %v472 = vsub.s32 0, %v471
    %v473 = vrot.slane %v91, %v472
    %v474 = vlaneseq
    %v475 = vshrl.u32 %v474, 7
    %v476 = vsub.s32 1, %v475
    %v477 = vrot.slane %v91, %v476
    %v512 = vunpack.c.l.b16 %v59
    %v513 = vunpack.c.h.b16 %v59
    %v514 = vunpack.c.l.b16 %v60
    %v515 = vunpack.c.h.b16 %v60
    %v516 = vunpack.c.l.b16 %v61
    %v517 = vunpack.c.h.b16 %v61
    %v518 = vunpack.c.l.b16 %v62
    %v519 = vunpack.c.h.b16 %v62
    %v520 = vunpack.c.l.b16 %v63
    %v521 = vunpack.c.h.b16 %v63
    %v522 = vunpack.c.l.b16 %v64
    %v523 = vunpack.c.h.b16 %v64
    %v524 = vunpack.c.l.b16 %v65
    %v525 = vunpack.c.h.b16 %v65
    %v526 = vunpack.c.l.b16 %v66
    %v527 = vunpack.c.h.b16 %v66
    %v528 = vunpack.c.l.b16 %v67
    %v529 = vunpack.c.h.b16 %v67
    %v530 = vunpack.c.l.b16 %v68
    %v531 = vunpack.c.h.b16 %v68
    %v532 = vunpack.c.l.b16 %v69
    %v533 = vunpack.c.h.b16 %v69
    %v534 = vunpack.c.l.b16 %v70
    %v535 = vunpack.c.h.b16 %v70
    %v536 = vunpack.c.l.b16 %v71
    %v537 = vunpack.c.h.b16 %v71
    %v538 = vunpack.c.l.b16 %v72
    %v539 = vunpack.c.h.b16 %v72
    %v540 = vunpack.c.l.b16 %v73
    %v541 = vunpack.c.h.b16 %v73
    %v542 = vunpack.c.l.b16 %v74
    %v543 = vunpack.c.h.b16 %v74
    %v544 = vunpack.c.l.b16 %v75
    %v545 = vunpack.c.h.b16 %v75
    %v546 = vunpack.c.l.b16 %v76
    %v547 = vunpack.c.h.b16 %v76
    %v548 = vunpack.c.l.b16 %v77
    %v549 = vunpack.c.h.b16 %v77
    %v550 = vunpack.c.l.b16 %v78
    %v551 = vunpack.c.h.b16 %v78
    %v552 = vunpack.c.l.b16 %v79
    %v553 = vunpack.c.h.b16 %v79
    %v554 = vunpack.c.l.b16 %v80
    %v555 = vunpack.c.h.b16 %v80
    %v556 = vunpack.c.l.b16 %v81
    %v557 = vunpack.c.h.b16 %v81
    %v558 = vunpack.c.l.b16 %v82
    %v559 = vunpack.c.h.b16 %v82
    %v560 = vunpack.c.l.b16 %v83
    %v561 = vunpack.c.h.b16 %v83
    %v562 = vunpack.c.l.b16 %v84
    %v563 = vunpack.c.h.b16 %v84
    %v564 = vunpack.c.l.b16 %v85
    %v565 = vunpack.c.h.b16 %v85
    %v566 = vunpack.c.l.b16 %v86
    %v567 = vunpack.c.h.b16 %v86
    %v568 = vunpack.c.l.b16 %v87
    %v569 = vunpack.c.h.b16 %v87
    %v570 = vunpack.c.l.b16 %v88
    %v571 = vunpack.c.h.b16 %v88
    %v572 = vunpack.c.l.b16 %v89
    %v573 = vunpack.c.h.b16 %v89
    %v574 = vunpack.c.l.b16 %v90
    %v575 = vunpack.c.h.b16 %v90
    %v576 = vpack.c.b16 %v514, %v512
    %v577 = vpack.c.b16 %v515, %v513
    %v578 = vpack.c.b16 %v518, %v516
    %v579 = vpack.c.b16 %v519, %v517
    %v580 = vpack.c.b16 %v522, %v520
    %v581 = vpack.c.b16 %v523, %v521
    %v582 = vpack.c.b16 %v526, %v524
    %v583 = vpack.c.b16 %v527, %v525
    %v584 = vpack.c.b16 %v530, %v528
    %v585 = vpack.c.b16 %v531, %v529
    %v586 = vpack.c.b16 %v534, %v532
    %v587 = vpack.c.b16 %v535, %v533
    %v588 = vpack.c.b16 %v538, %v536
    %v589 = vpack.c.b16 %v539, %v537
    %v590 = vpack.c.b16 %v542, %v540
    %v591 = vpack.c.b16 %v543, %v541
    %v592 = vpack.c.b16 %v546, %v544
    %v593 = vpack.c.b16 %v547, %v545
    %v594 = vpack.c.b16 %v550, %v548
    %v595 = vpack.c.b16 %v551, %v549
    %v596 = vpack.c.b16 %v554, %v552
    %v597 = vpack.c.b16 %v555, %v553
    %v598 = vpack.c.b16 %v558, %v556
    %v599 = vpack.c.b16 %v559, %v557
    %v600 = vpack.c.b16 %v562, %v560
    %v601 = vpack.c.b16 %v563, %v561
    %v602 = vpack.c.b16 %v566, %v564
    %v603 = vpack.c.b16 %v567, %v565
    %v604 = vpack.c.b16 %v570, %v568
    %v605 = vpack.c.b16 %v571, %v569
    %v606 = vpack.c.b16 %v574, %v572
    %v607 = vpack.c.b16 %v575, %v573
    %640 = vmatprep.subr.bf16.mxu0 %v577
    %641 = vmatpush1.bf16.msra.mxu0 %v576
    %642 = vmatprep.subr.bf16.mxu0 %v579
    %643 = vmatpush1.bf16.msra.mxu0 %v578
    %644 = vmatprep.subr.bf16.mxu0 %v581
    %645 = vmatpush1.bf16.msra.mxu0 %v580
    %646 = vmatprep.subr.bf16.mxu0 %v583
    %647 = vmatpush1.bf16.msra.mxu0 %v582
    %648 = vmatprep.subr.bf16.mxu0 %v585
    %649 = vmatpush1.bf16.msra.mxu0 %v584
    %650 = vmatprep.subr.bf16.mxu0 %v587
    %651 = vmatpush1.bf16.msra.mxu0 %v586
    %652 = vmatprep.subr.bf16.mxu0 %v589
    %653 = vmatpush1.bf16.msra.mxu0 %v588
    %654 = vmatprep.subr.bf16.mxu0 %v591
    %655 = vmatpush1.bf16.msra.mxu0 %v590
    %656 = vmatprep.subr.bf16.mxu0 %v593
    %657 = vmatpush1.bf16.msra.mxu0 %v592
    %658 = vmatprep.subr.bf16.mxu0 %v595
    %659 = vmatpush1.bf16.msra.mxu0 %v594
    %660 = vmatprep.subr.bf16.mxu0 %v597
    %661 = vmatpush1.bf16.msra.mxu0 %v596
    %662 = vmatprep.subr.bf16.mxu0 %v599
    %663 = vmatpush1.bf16.msra.mxu0 %v598
    %664 = vmatprep.subr.bf16.mxu0 %v601
    %665 = vmatpush1.bf16.msra.mxu0 %v600
    %666 = vmatprep.subr.bf16.mxu0 %v603
    %667 = vmatpush1.bf16.msra.mxu0 %v602
    %668 = vmatprep.subr.bf16.mxu0 %v605
    %669 = vmatpush1.bf16.msra.mxu0 %v604
    %670 = vmatprep.subr.bf16.mxu0 %v607
    %671 = vmatpush1.bf16.msra.mxu0 %v606
    %672 = vmatprep.mubr.bf16.mxu0 %v462
    %673 = vmatmul.mubr.bf16.gmra.mrb[0].mxu0 %v461
    %v674 = vpop.f32.mrb[0].mxu0
    %v675 = vadd.f32 %v473, %v674
    %v676 = vpop.f32.mrb[0].mxu0
    %v677 = vadd.f32 %v477, %v676
    %v678 = vpop.f32.mrb[0].mxu0
    %v679 = vadd.f32 %v473, %v678
    %v680 = vpop.f32.mrb[0].mxu0
    %v681 = vadd.f32 %v477, %v680
    %682 = vmatprep.mubr.bf16.mxu0 %v464
    %683 = vmatmul.mubr.bf16.gmra.mrb[0].mxu0 %v463
    %v684 = vpop.f32.mrb[0].mxu0
    %v685 = vadd.f32 %v473, %v684
    %v686 = vpop.f32.mrb[0].mxu0
    %v687 = vadd.f32 %v477, %v686
    %v688 = vpop.f32.mrb[0].mxu0
    %v689 = vadd.f32 %v473, %v688
    %v690 = vpop.f32.mrb[0].mxu0
    %v691 = vadd.f32 %v477, %v690
    %692 = vmatprep.mubr.bf16.mxu0 %v466
    %693 = vmatmul.mubr.bf16.gmra.mrb[0].mxu0 %v465
    %v694 = vpop.f32.mrb[0].mxu0
    %v695 = vadd.f32 %v473, %v694
    %v696 = vpop.f32.mrb[0].mxu0
    %v697 = vadd.f32 %v477, %v696
    %v698 = vpop.f32.mrb[0].mxu0
    %v699 = vadd.f32 %v473, %v698
    %v700 = vpop.f32.mrb[0].mxu0
    %v701 = vadd.f32 %v477, %v700
    %702 = vmatprep.mubr.bf16.mxu0 %v468
    %703 = vmatmul.mubr.bf16.gmra.mrb[0].mxu0 %v467
    %v704 = vpop.f32.mrb[0].mxu0
    %v705 = vadd.f32 %v473, %v704
    %v706 = vpop.f32.mrb[0].mxu0
    %v707 = vadd.f32 %v477, %v706
    %v708 = vpop.f32.mrb[0].mxu0
    %v709 = vpop.f32.mrb[0].mxu0
    %710 = vdwg.mxu0
    %v711 = vadd.f32 %v675, %v677
    %712 = vadd.xlane.f32.xlu0 %v711
    %v713 = vpop.xlane.xlu0 %712
    %v714 = vadd.f32 %v679, %v681
    %715 = vadd.xlane.f32.xlu0 %v714
    %v716 = vpop.xlane.xlu0 %715
    %v717 = vadd.f32 %v685, %v687
    %718 = vadd.xlane.f32.xlu0 %v717
    %v719 = vpop.xlane.xlu0 %718
    %v720 = vadd.f32 %v689, %v691
    %721 = vadd.xlane.f32.xlu0 %v720
    %v722 = vpop.xlane.xlu0 %721
    %v723 = vadd.f32 %v695, %v697
    %724 = vadd.xlane.f32.xlu0 %v723
    %v725 = vpop.xlane.xlu0 %724
    %v726 = vadd.f32 %v699, %v701
    %727 = vadd.xlane.f32.xlu0 %v726
    %v728 = vpop.xlane.xlu0 %727
    %v729 = vadd.f32 %v705, %v707
    %730 = vadd.xlane.f32.xlu0 %v729
    %v731 = vpop.xlane.xlu0 %730
    %v732 = vmul.f32 %v675, %v675
    %v733 = vmul.f32 %v677, %v677
    %v734 = vmul.f32 %v679, %v679
    %v735 = vmul.f32 %v681, %v681
    %v736 = vmul.f32 %v685, %v685
    %v737 = vmul.f32 %v687, %v687
    %v738 = vmul.f32 %v689, %v689
    %v739 = vmul.f32 %v691, %v691
    %v740 = vmul.f32 %v695, %v695
    %v741 = vmul.f32 %v697, %v697
    %v742 = vmul.f32 %v699, %v699
    %v743 = vmul.f32 %v701, %v701
    %v744 = vmul.f32 %v705, %v705
    %v745 = vmul.f32 %v707, %v707
    %v746 = vadd.f32 %v732, %v733
    %747 = vadd.xlane.f32.xlu0 %v746
    %v748 = vpop.xlane.xlu0 %747
    %v749 = vadd.f32 %v734, %v735
    %750 = vadd.xlane.f32.xlu0 %v749
    %v751 = vpop.xlane.xlu0 %750
    %v752 = vadd.f32 %v736, %v737
    %753 = vadd.xlane.f32.xlu0 %v752
    %v754 = vpop.xlane.xlu0 %753
    %v755 = vadd.f32 %v738, %v739
    %756 = vadd.xlane.f32.xlu0 %v755
    %v757 = vpop.xlane.xlu0 %756
    %v758 = vadd.f32 %v740, %v741
    %759 = vadd.xlane.f32.xlu0 %v758
    %v760 = vpop.xlane.xlu0 %759
    %v761 = vadd.f32 %v742, %v743
    %762 = vadd.xlane.f32.xlu0 %v761
    %v763 = vpop.xlane.xlu0 %762
    %v764 = vadd.f32 %v744, %v745
    %765 = vadd.xlane.f32.xlu0 %v764
    %v766 = vpop.xlane.xlu0 %765
    %v767 = vmul.f32 %v713, 0.00390625
    %v768 = vmul.f32 %v716, 0.00390625
    %v769 = vmul.f32 %v719, 0.00390625
    %v770 = vmul.f32 %v722, 0.00390625
    %v771 = vmul.f32 %v725, 0.00390625
    %v772 = vmul.f32 %v728, 0.00390625
    %v773 = vmul.f32 %v731, 0.00390625
    %v774 = vmul.f32 %v748, 0.00390625
    %v775 = vmul.f32 %v751, 0.00390625
    %v776 = vmul.f32 %v754, 0.00390625
    %v777 = vmul.f32 %v757, 0.00390625
    %v778 = vmul.f32 %v760, 0.00390625
    %v779 = vmul.f32 %v763, 0.00390625
    %v780 = vmul.f32 %v766, 0.00390625
    %v781 = vmul.f32 %v767, %v767
    %v782 = vmul.f32 %v768, %v768
    %v783 = vmul.f32 %v769, %v769
    %v784 = vmul.f32 %v770, %v770
    %v785 = vmul.f32 %v771, %v771
    %v786 = vmul.f32 %v772, %v772
    %v787 = vmul.f32 %v773, %v773
    %v788 = vsub.f32 %v774, %v781
    %v789 = vsub.f32 %v775, %v782
    %v790 = vsub.f32 %v776, %v783
    %v791 = vsub.f32 %v777, %v784
    %v792 = vsub.f32 %v778, %v785
    %v793 = vsub.f32 %v779, %v786
    %v794 = vsub.f32 %v780, %v787
    %v795 = vsub.f32 %v675, %v767
    %v796 = vsub.f32 %v677, %v767
    %v797 = vsub.f32 %v679, %v768
    %v798 = vsub.f32 %v681, %v768
    %v799 = vsub.f32 %v685, %v769
    %v800 = vsub.f32 %v687, %v769
    %v801 = vsub.f32 %v689, %v770
    %v802 = vsub.f32 %v691, %v770
    %v803 = vsub.f32 %v695, %v771
    %v804 = vsub.f32 %v697, %v771
    %v805 = vsub.f32 %v699, %v772
    %v806 = vsub.f32 %v701, %v772
    %v807 = vsub.f32 %v705, %v773
    %v808 = vsub.f32 %v707, %v773
    %v809 = vadd.f32 %v788, 1e-05
    %v810 = vadd.f32 %v789, 1e-05
    %v811 = vadd.f32 %v790, 1e-05
    %v812 = vadd.f32 %v791, 1e-05
    %v813 = vadd.f32 %v792, 1e-05
    %v814 = vadd.f32 %v793, 1e-05
    %v815 = vadd.f32 %v794, 1e-05
    %v816 = vrsqrt.pop %v809
    %v817 = vrsqrt.pop %v810
    %v818 = vrsqrt.pop %v811
    %v819 = vrsqrt.pop %v812
    %v820 = vrsqrt.pop %v813
    %v821 = vrsqrt.pop %v814
    %v822 = vrsqrt.pop %v815
    %v823 = vmul.f32 %v795, %v816
    %v824 = vmul.f32 %v796, %v816
    %v825 = vmul.f32 %v797, %v817
    %v826 = vmul.f32 %v798, %v817
    %v827 = vmul.f32 %v799, %v818
    %v828 = vmul.f32 %v800, %v818
    %v829 = vmul.f32 %v801, %v819
    %v830 = vmul.f32 %v802, %v819
    %v831 = vmul.f32 %v803, %v820
    %v832 = vmul.f32 %v804, %v820
    %v833 = vmul.f32 %v805, %v821
    %v834 = vmul.f32 %v806, %v821
    %v835 = vmul.f32 %v807, %v822
    %v836 = vmul.f32 %v808, %v822
    %v838 = vlaneseq
    %v839 = vshrl.u32 %v838, 7
    %v840 = vsub.s32 0, %v839
    %v841 = vrot.slane %v92, %v840
    %v842 = vlaneseq
    %v843 = vshrl.u32 %v842, 7
    %v844 = vsub.s32 1, %v843
    %v845 = vrot.slane %v92, %v844
    %v848 = vmul.f32 %v823, %v841
    %v849 = vmul.f32 %v824, %v845
    %v850 = vmul.f32 %v825, %v841
    %v851 = vmul.f32 %v826, %v845
    %v852 = vmul.f32 %v827, %v841
    %v853 = vmul.f32 %v828, %v845
    %v854 = vmul.f32 %v829, %v841
    %v855 = vmul.f32 %v830, %v845
    %v856 = vmul.f32 %v831, %v841
    %v857 = vmul.f32 %v832, %v845
    %v858 = vmul.f32 %v833, %v841
    %v859 = vmul.f32 %v834, %v845
    %v860 = vmul.f32 %v835, %v841
    %v861 = vmul.f32 %v836, %v845
    %v863 = vlaneseq
    %v864 = vshrl.u32 %v863, 7
    %v865 = vsub.s32 0, %v864
    %v866 = vrot.slane %v93, %v865
    %v867 = vlaneseq
    %v868 = vshrl.u32 %v867, 7
    %v869 = vsub.s32 1, %v868
    %v870 = vrot.slane %v93, %v869
    %v873 = vadd.f32 %v848, %v866
    %v874 = vadd.f32 %v849, %v870
    %v875 = vadd.f32 %v850, %v866
    %v876 = vadd.f32 %v851, %v870
    %v877 = vadd.f32 %v852, %v866
    %v878 = vadd.f32 %v853, %v870
    %v879 = vadd.f32 %v854, %v866
    %v880 = vadd.f32 %v855, %v870
    %v881 = vadd.f32 %v856, %v866
    %v882 = vadd.f32 %v857, %v870
    %v883 = vadd.f32 %v858, %v866
    %v884 = vadd.f32 %v859, %v870
    %v885 = vadd.f32 %v860, %v866
    %v886 = vadd.f32 %v861, %v870
    %vm887 = vcmp.ge.f32.partialorder %v873, 0.0
    %vm888 = vcmp.ge.f32.partialorder %v874, 0.0
    %vm889 = vcmp.ge.f32.partialorder %v875, 0.0
    %vm890 = vcmp.ge.f32.partialorder %v876, 0.0
    %vm891 = vcmp.ge.f32.partialorder %v877, 0.0
    %vm892 = vcmp.ge.f32.partialorder %v878, 0.0
    %vm893 = vcmp.ge.f32.partialorder %v879, 0.0
    %vm894 = vcmp.ge.f32.partialorder %v880, 0.0
    %vm895 = vcmp.ge.f32.partialorder %v881, 0.0
    %vm896 = vcmp.ge.f32.partialorder %v882, 0.0
    %vm897 = vcmp.ge.f32.partialorder %v883, 0.0
    %vm898 = vcmp.ge.f32.partialorder %v884, 0.0
    %vm899 = vcmp.ge.f32.partialorder %v885, 0.0
    %vm900 = vcmp.ge.f32.partialorder %v886, 0.0
    %v901 = vmul.f32 %v873, 0.01
    %v902 = vmul.f32 %v874, 0.01
    %v903 = vmul.f32 %v875, 0.01
    %v904 = vmul.f32 %v876, 0.01
    %v905 = vmul.f32 %v877, 0.01
    %v906 = vmul.f32 %v878, 0.01
    %v907 = vmul.f32 %v879, 0.01
    %v908 = vmul.f32 %v880, 0.01
    %v909 = vmul.f32 %v881, 0.01
    %v910 = vmul.f32 %v882, 0.01
    %v911 = vmul.f32 %v883, 0.01
    %v912 = vmul.f32 %v884, 0.01
    %v913 = vmul.f32 %v885, 0.01
    %v914 = vmul.f32 %v886, 0.01
    %v915 = vsel %vm887, %v873, %v901
    %v916 = vsel %vm888, %v874, %v902
    %v917 = vsel %vm889, %v875, %v903
    %v918 = vsel %vm890, %v876, %v904
    %v919 = vsel %vm891, %v877, %v905
    %v920 = vsel %vm892, %v878, %v906
    %v921 = vsel %vm893, %v879, %v907
    %v922 = vsel %vm894, %v880, %v908
    %v923 = vsel %vm895, %v881, %v909
    %v924 = vsel %vm896, %v882, %v910
    %v925 = vsel %vm897, %v883, %v911
    %v926 = vsel %vm898, %v884, %v912
    %v927 = vsel %vm899, %v885, %v913
    %v928 = vsel %vm900, %v886, %v914
    %v929 = vpack.c.bf16 %v917, %v915
    %v930 = vpack.c.bf16 %v918, %v916
    %v931 = vpack.c.bf16 %v921, %v919
    %v932 = vpack.c.bf16 %v922, %v920
    %v933 = vpack.c.bf16 %v925, %v923
    %v934 = vpack.c.bf16 %v926, %v924
    %v935 = vpack.c.bf16 %v927, %v927
    %v936 = vpack.c.bf16 %v928, %v928
    %v938 = vlaneseq
    %v939 = vshrl.u32 %v938, 7
    %v940 = vsub.s32 0, %v939
    %v941 = vrot.slane %v126, %v940
    %v975 = vunpack.c.l.b16 %v94
    %v976 = vunpack.c.l.b16 %v95
    %v977 = vunpack.c.l.b16 %v96
    %v978 = vunpack.c.l.b16 %v97
    %v979 = vunpack.c.l.b16 %v98
    %v980 = vunpack.c.l.b16 %v99
    %v981 = vunpack.c.l.b16 %v100
    %v982 = vunpack.c.l.b16 %v101
    %v983 = vunpack.c.l.b16 %v102
    %v984 = vunpack.c.l.b16 %v103
    %v985 = vunpack.c.l.b16 %v104
    %v986 = vunpack.c.l.b16 %v105
    %v987 = vunpack.c.l.b16 %v106
    %v988 = vunpack.c.l.b16 %v107
    %v989 = vunpack.c.l.b16 %v108
    %v990 = vunpack.c.l.b16 %v109
    %v991 = vunpack.c.l.b16 %v110
    %v992 = vunpack.c.l.b16 %v111
    %v993 = vunpack.c.l.b16 %v112
    %v994 = vunpack.c.l.b16 %v113
    %v995 = vunpack.c.l.b16 %v114
    %v996 = vunpack.c.l.b16 %v115
    %v997 = vunpack.c.l.b16 %v116
    %v998 = vunpack.c.l.b16 %v117
    %v999 = vunpack.c.l.b16 %v118
    %v1000 = vunpack.c.l.b16 %v119
    %v1001 = vunpack.c.l.b16 %v120
    %v1002 = vunpack.c.l.b16 %v121
    %v1003 = vunpack.c.l.b16 %v122
    %v1004 = vunpack.c.l.b16 %v123
    %v1005 = vunpack.c.l.b16 %v124
    %v1006 = vunpack.c.l.b16 %v125
    %v1007 = vpack.c.b16 %v976, %v975
    %v1008 = vpack.c.b16 %v978, %v977
    %v1009 = vpack.c.b16 %v980, %v979
    %v1010 = vpack.c.b16 %v982, %v981
    %v1011 = vpack.c.b16 %v984, %v983
    %v1012 = vpack.c.b16 %v986, %v985
    %v1013 = vpack.c.b16 %v988, %v987
    %v1014 = vpack.c.b16 %v990, %v989
    %v1015 = vpack.c.b16 %v992, %v991
    %v1016 = vpack.c.b16 %v994, %v993
    %v1017 = vpack.c.b16 %v996, %v995
    %v1018 = vpack.c.b16 %v998, %v997
    %v1019 = vpack.c.b16 %v1000, %v999
    %v1020 = vpack.c.b16 %v1002, %v1001
    %v1021 = vpack.c.b16 %v1004, %v1003
    %v1022 = vpack.c.b16 %v1006, %v1005
    %1039 = vmatprep.subr.bf16.mxu0 0
    %1040 = vmatpush1.bf16.msra.mxu0 %v1007
    %1041 = vmatprep.subr.bf16.mxu0 0
    %1042 = vmatpush1.bf16.msra.mxu0 %v1008
    %1043 = vmatprep.subr.bf16.mxu0 0
    %1044 = vmatpush1.bf16.msra.mxu0 %v1009
    %1045 = vmatprep.subr.bf16.mxu0 0
    %1046 = vmatpush1.bf16.msra.mxu0 %v1010
    %1047 = vmatprep.subr.bf16.mxu0 0
    %1048 = vmatpush1.bf16.msra.mxu0 %v1011
    %1049 = vmatprep.subr.bf16.mxu0 0
    %1050 = vmatpush1.bf16.msra.mxu0 %v1012
    %1051 = vmatprep.subr.bf16.mxu0 0
    %1052 = vmatpush1.bf16.msra.mxu0 %v1013
    %1053 = vmatprep.subr.bf16.mxu0 0
    %1054 = vmatpush1.bf16.msra.mxu0 %v1014
    %1055 = vmatprep.subr.bf16.mxu0 0
    %1056 = vmatpush1.bf16.msra.mxu0 %v1015
    %1057 = vmatprep.subr.bf16.mxu0 0
    %1058 = vmatpush1.bf16.msra.mxu0 %v1016
    %1059 = vmatprep.subr.bf16.mxu0 0
    %1060 = vmatpush1.bf16.msra.mxu0 %v1017
    %1061 = vmatprep.subr.bf16.mxu0 0
    %1062 = vmatpush1.bf16.msra.mxu0 %v1018
    %1063 = vmatprep.subr.bf16.mxu0 0
    %1064 = vmatpush1.bf16.msra.mxu0 %v1019
    %1065 = vmatprep.subr.bf16.mxu0 0
    %1066 = vmatpush1.bf16.msra.mxu0 %v1020
    %1067 = vmatprep.subr.bf16.mxu0 0
    %1068 = vmatpush1.bf16.msra.mxu0 %v1021
    %1069 = vmatprep.subr.bf16.mxu0 0
    %1070 = vmatpush1.bf16.msra.mxu0 %v1022
    %1071 = vmatprep.mubr.bf16.mxu0 %v930
    %1072 = vmatmul.mubr.bf16.gmra.mrb[0].mxu0 %v929
    %v1073 = vpop.f32.mrb[0].mxu0
    %v1074 = vadd.f32 %v941, %v1073
    %v1075 = vpop.f32.mrb[0].mxu0
    %v1076 = vpop.f32.mrb[0].mxu0
    %v1077 = vadd.f32 %v941, %v1076
    %v1078 = vpop.f32.mrb[0].mxu0
    %1079 = vmatprep.mubr.bf16.mxu0 %v932
    %1080 = vmatmul.mubr.bf16.gmra.mrb[0].mxu0 %v931
    %v1081 = vpop.f32.mrb[0].mxu0
    %v1082 = vadd.f32 %v941, %v1081
    %v1083 = vpop.f32.mrb[0].mxu0
    %v1084 = vpop.f32.mrb[0].mxu0
    %v1085 = vadd.f32 %v941, %v1084
    %v1086 = vpop.f32.mrb[0].mxu0
    %1087 = vmatprep.mubr.bf16.mxu0 %v934
    %1088 = vmatmul.mubr.bf16.gmra.mrb[0].mxu0 %v933
    %v1089 = vpop.f32.mrb[0].mxu0
    %v1090 = vadd.f32 %v941, %v1089
    %v1091 = vpop.f32.mrb[0].mxu0
    %v1092 = vpop.f32.mrb[0].mxu0
    %v1093 = vadd.f32 %v941, %v1092
    %v1094 = vpop.f32.mrb[0].mxu0
    %1095 = vmatprep.mubr.bf16.mxu0 %v936
    %1096 = vmatmul.mubr.bf16.gmra.mrb[0].mxu0 %v935
    %v1097 = vpop.f32.mrb[0].mxu0
    %v1098 = vadd.f32 %v941, %v1097
    %v1099 = vpop.f32.mrb[0].mxu0
    %v1100 = vpop.f32.mrb[0].mxu0
    %v1101 = vpop.f32.mrb[0].mxu0
    %1102 = vdwg.mxu0
    %1103 = vst [vmem:[#allocation5] sm:$0xff] %v1074
    %1104 = vst [vmem:[#allocation5 + $0x8] sm:$0xff] %v1077
    %1105 = vst [vmem:[#allocation5 + $0x10] sm:$0xff] %v1082
    %1106 = vst [vmem:[#allocation5 + $0x18] sm:$0xff] %v1085
    %1107 = vst [vmem:[#allocation5 + $0x20] sm:$0xff] %v1090
    %1108 = vst [vmem:[#allocation5 + $0x28] sm:$0xff] %v1093
    %1109 = vst [vmem:[#allocation5 + $0x30] sm:$0xff] %v1098
    %v1110 = vld [vmem:[%s0 + $0x38] sm:$0xff]
    %v1111 = vld [vmem:[%s0 + $0x40] sm:$0xff]
    %v1112 = vld [vmem:[%s0 + $0x48] sm:$0xff]
    %v1113 = vld [vmem:[%s0 + $0x50] sm:$0xff]
    %v1114 = vld [vmem:[%s0 + $0x58] sm:$0xff]
    %v1115 = vld [vmem:[%s0 + $0x60] sm:$0xff]
    %v1116 = vld [vmem:[%s0 + $0x68] sm:$0xff]
    %v1117 = vpack.c.bf16 %v1111, %v1110
    %v1118 = vpack.c.bf16 %v1113, %v1112
    %v1119 = vpack.c.bf16 %v1115, %v1114
    %v1120 = vpack.c.bf16 %v1116, %v1116
    %v1122 = vsel %vm159, %v1117, 0
    %v1125 = vsel %vm159, %v1118, 0
    %v1128 = vsel %vm159, %v1119, 0
    %v1131 = vsel %vm159, %v1120, 0
    %1133 = vmatprep.subr.bf16.mxu0 %v156
    %1134 = vmatpush1.bf16.msra.mxu0 %v155
    %1135 = vmatprep.subr.bf16.mxu0 0
    %1136 = vmatpush1.bf16.msra.mxu0 0
    %1137 = vmatprep.subr.bf16.mxu0 0
    %1138 = vmatpush1.bf16.msra.mxu0 0
    %1139 = vmatprep.subr.bf16.mxu0 0
    %1140 = vmatpush1.bf16.msra.mxu0 0
    %1141 = vmatprep.subr.bf16.mxu0 0
    %1142 = vmatpush1.bf16.msra.mxu0 0
    %1143 = vmatprep.subr.bf16.mxu0 0
    %1144 = vmatpush1.bf16.msra.mxu0 0
    %1145 = vmatprep.subr.bf16.mxu0 0
    %1146 = vmatpush1.bf16.msra.mxu0 0
    %1147 = vmatprep.subr.bf16.mxu0 0
    %1148 = vmatpush1.bf16.msra.mxu0 0
    %1149 = vmatprep.subr.bf16.mxu0 0
    %1150 = vmatpush1.bf16.msra.mxu0 0
    %1151 = vmatprep.subr.bf16.mxu0 0
    %1152 = vmatpush1.bf16.msra.mxu0 0
    %1153 = vmatprep.subr.bf16.mxu0 0
    %1154 = vmatpush1.bf16.msra.mxu0 0
    %1155 = vmatprep.subr.bf16.mxu0 0
    %1156 = vmatpush1.bf16.msra.mxu0 0
    %1157 = vmatprep.subr.bf16.mxu0 0
    %1158 = vmatpush1.bf16.msra.mxu0 0
    %1159 = vmatprep.subr.bf16.mxu0 0
    %1160 = vmatpush1.bf16.msra.mxu0 0
    %1161 = vmatprep.subr.bf16.mxu0 0
    %1162 = vmatpush1.bf16.msra.mxu0 0
    %1163 = vmatprep.subr.bf16.mxu0 0
    %1164 = vmatpush1.bf16.msra.mxu0 0
    %1165 = vmatprep.mubr.bf16.mxu0 0
    %1166 = vmatmul.mubr.bf16.gmra.mrb[0].mxu0 %v1122
    %v1167 = vpop.f32.mrb[0].mxu0
    %v1168 = vadd.f32 %v142, %v1167
    %v1169 = vpop.f32.mrb[0].mxu0
    %v1170 = vadd.f32 %v146, %v1169
    %v1171 = vpop.f32.mrb[0].mxu0
    %v1172 = vadd.f32 %v142, %v1171
    %v1173 = vpop.f32.mrb[0].mxu0
    %v1174 = vadd.f32 %v146, %v1173
    %1175 = vmatprep.mubr.bf16.mxu0 0
    %1176 = vmatmul.mubr.bf16.gmra.mrb[0].mxu0 %v1125
    %v1177 = vpop.f32.mrb[0].mxu0
    %v1178 = vadd.f32 %v142, %v1177
    %v1179 = vpop.f32.mrb[0].mxu0
    %v1180 = vadd.f32 %v146, %v1179
    %v1181 = vpop.f32.mrb[0].mxu0
    %v1182 = vadd.f32 %v142, %v1181
    %v1183 = vpop.f32.mrb[0].mxu0
    %v1184 = vadd.f32 %v146, %v1183
    %1185 = vmatprep.mubr.bf16.mxu0 0
    %1186 = vmatmul.mubr.bf16.gmra.mrb[0].mxu0 %v1128
    %v1187 = vpop.f32.mrb[0].mxu0
    %v1188 = vadd.f32 %v142, %v1187
    %v1189 = vpop.f32.mrb[0].mxu0
    %v1190 = vadd.f32 %v146, %v1189
    %v1191 = vpop.f32.mrb[0].mxu0
    %v1192 = vadd.f32 %v142, %v1191
    %v1193 = vpop.f32.mrb[0].mxu0
    %v1194 = vadd.f32 %v146, %v1193
    %1195 = vmatprep.mubr.bf16.mxu0 0
    %1196 = vmatmul.mubr.bf16.gmra.mrb[0].mxu0 %v1131
    %v1197 = vpop.f32.mrb[0].mxu0
    %v1198 = vadd.f32 %v142, %v1197
    %v1199 = vpop.f32.mrb[0].mxu0
    %v1200 = vadd.f32 %v146, %v1199
    %v1201 = vpop.f32.mrb[0].mxu0
    %v1202 = vpop.f32.mrb[0].mxu0
    %1203 = vdwg.mxu0
    %v1204 = vadd.f32 %v1168, %v1170
    %1205 = vadd.xlane.f32.xlu0 %v1204
    %v1206 = vpop.xlane.xlu0 %1205
    %v1207 = vadd.f32 %v1172, %v1174
    %1208 = vadd.xlane.f32.xlu0 %v1207
    %v1209 = vpop.xlane.xlu0 %1208
    %v1210 = vadd.f32 %v1178, %v1180
    %1211 = vadd.xlane.f32.xlu0 %v1210
    %v1212 = vpop.xlane.xlu0 %1211
    %v1213 = vadd.f32 %v1182, %v1184
    %1214 = vadd.xlane.f32.xlu0 %v1213
    %v1215 = vpop.xlane.xlu0 %1214
    %v1216 = vadd.f32 %v1188, %v1190
    %1217 = vadd.xlane.f32.xlu0 %v1216
    %v1218 = vpop.xlane.xlu0 %1217
    %v1219 = vadd.f32 %v1192, %v1194
    %1220 = vadd.xlane.f32.xlu0 %v1219
    %v1221 = vpop.xlane.xlu0 %1220
    %v1222 = vadd.f32 %v1198, %v1200
    %1223 = vadd.xlane.f32.xlu0 %v1222
    %v1224 = vpop.xlane.xlu0 %1223
    %v1225 = vmul.f32 %v1168, %v1168
    %v1226 = vmul.f32 %v1170, %v1170
    %v1227 = vmul.f32 %v1172, %v1172
    %v1228 = vmul.f32 %v1174, %v1174
    %v1229 = vmul.f32 %v1178, %v1178
    %v1230 = vmul.f32 %v1180, %v1180
    %v1231 = vmul.f32 %v1182, %v1182
    %v1232 = vmul.f32 %v1184, %v1184
    %v1233 = vmul.f32 %v1188, %v1188
    %v1234 = vmul.f32 %v1190, %v1190
    %v1235 = vmul.f32 %v1192, %v1192
    %v1236 = vmul.f32 %v1194, %v1194
    %v1237 = vmul.f32 %v1198, %v1198
    %v1238 = vmul.f32 %v1200, %v1200
    %v1239 = vadd.f32 %v1225, %v1226
    %1240 = vadd.xlane.f32.xlu0 %v1239
    %v1241 = vpop.xlane.xlu0 %1240
    %v1242 = vadd.f32 %v1227, %v1228
    %1243 = vadd.xlane.f32.xlu0 %v1242
    %v1244 = vpop.xlane.xlu0 %1243
    %v1245 = vadd.f32 %v1229, %v1230
    %1246 = vadd.xlane.f32.xlu0 %v1245
    %v1247 = vpop.xlane.xlu0 %1246
    %v1248 = vadd.f32 %v1231, %v1232
    %1249 = vadd.xlane.f32.xlu0 %v1248
    %v1250 = vpop.xlane.xlu0 %1249
    %v1251 = vadd.f32 %v1233, %v1234
    %1252 = vadd.xlane.f32.xlu0 %v1251
    %v1253 = vpop.xlane.xlu0 %1252
    %v1254 = vadd.f32 %v1235, %v1236
    %1255 = vadd.xlane.f32.xlu0 %v1254
    %v1256 = vpop.xlane.xlu0 %1255
    %v1257 = vadd.f32 %v1237, %v1238
    %1258 = vadd.xlane.f32.xlu0 %v1257
    %v1259 = vpop.xlane.xlu0 %1258
    %v1260 = vmul.f32 %v1206, 0.00390625
    %v1261 = vmul.f32 %v1209, 0.00390625
    %v1262 = vmul.f32 %v1212, 0.00390625
    %v1263 = vmul.f32 %v1215, 0.00390625
    %v1264 = vmul.f32 %v1218, 0.00390625
    %v1265 = vmul.f32 %v1221, 0.00390625
    %v1266 = vmul.f32 %v1224, 0.00390625
    %v1267 = vmul.f32 %v1241, 0.00390625
    %v1268 = vmul.f32 %v1244, 0.00390625
    %v1269 = vmul.f32 %v1247, 0.00390625
    %v1270 = vmul.f32 %v1250, 0.00390625
    %v1271 = vmul.f32 %v1253, 0.00390625
    %v1272 = vmul.f32 %v1256, 0.00390625
    %v1273 = vmul.f32 %v1259, 0.00390625
    %v1274 = vmul.f32 %v1260, %v1260
    %v1275 = vmul.f32 %v1261, %v1261
    %v1276 = vmul.f32 %v1262, %v1262
    %v1277 = vmul.f32 %v1263, %v1263
    %v1278 = vmul.f32 %v1264, %v1264
    %v1279 = vmul.f32 %v1265, %v1265
    %v1280 = vmul.f32 %v1266, %v1266
    %v1281 = vsub.f32 %v1267, %v1274
    %v1282 = vsub.f32 %v1268, %v1275
    %v1283 = vsub.f32 %v1269, %v1276
    %v1284 = vsub.f32 %v1270, %v1277
    %v1285 = vsub.f32 %v1271, %v1278
    %v1286 = vsub.f32 %v1272, %v1279
    %v1287 = vsub.f32 %v1273, %v1280
    %v1288 = vsub.f32 %v1168, %v1260
    %v1289 = vsub.f32 %v1170, %v1260
    %v1290 = vsub.f32 %v1172, %v1261
    %v1291 = vsub.f32 %v1174, %v1261
    %v1292 = vsub.f32 %v1178, %v1262
    %v1293 = vsub.f32 %v1180, %v1262
    %v1294 = vsub.f32 %v1182, %v1263
    %v1295 = vsub.f32 %v1184, %v1263
    %v1296 = vsub.f32 %v1188, %v1264
    %v1297 = vsub.f32 %v1190, %v1264
    %v1298 = vsub.f32 %v1192, %v1265
    %v1299 = vsub.f32 %v1194, %v1265
    %v1300 = vsub.f32 %v1198, %v1266
    %v1301 = vsub.f32 %v1200, %v1266
    %v1302 = vadd.f32 %v1281, 1e-05
    %v1303 = vadd.f32 %v1282, 1e-05
    %v1304 = vadd.f32 %v1283, 1e-05
    %v1305 = vadd.f32 %v1284, 1e-05
    %v1306 = vadd.f32 %v1285, 1e-05
    %v1307 = vadd.f32 %v1286, 1e-05
    %v1308 = vadd.f32 %v1287, 1e-05
    %v1309 = vrsqrt.pop %v1302
    %v1310 = vrsqrt.pop %v1303
    %v1311 = vrsqrt.pop %v1304
    %v1312 = vrsqrt.pop %v1305
    %v1313 = vrsqrt.pop %v1306
    %v1314 = vrsqrt.pop %v1307
    %v1315 = vrsqrt.pop %v1308
    %v1316 = vmul.f32 %v1288, %v1309
    %v1317 = vmul.f32 %v1289, %v1309
    %v1318 = vmul.f32 %v1290, %v1310
    %v1319 = vmul.f32 %v1291, %v1310
    %v1320 = vmul.f32 %v1292, %v1311
    %v1321 = vmul.f32 %v1293, %v1311
    %v1322 = vmul.f32 %v1294, %v1312
    %v1323 = vmul.f32 %v1295, %v1312
    %v1324 = vmul.f32 %v1296, %v1313
    %v1325 = vmul.f32 %v1297, %v1313
    %v1326 = vmul.f32 %v1298, %v1314
    %v1327 = vmul.f32 %v1299, %v1314
    %v1328 = vmul.f32 %v1300, %v1315
    %v1329 = vmul.f32 %v1301, %v1315
    %v1330 = vmul.f32 %v1316, %v373
    %v1331 = vmul.f32 %v1317, %v377
    %v1332 = vmul.f32 %v1318, %v373
    %v1333 = vmul.f32 %v1319, %v377
    %v1334 = vmul.f32 %v1320, %v373
    %v1335 = vmul.f32 %v1321, %v377
    %v1336 = vmul.f32 %v1322, %v373
    %v1337 = vmul.f32 %v1323, %v377
    %v1338 = vmul.f32 %v1324, %v373
    %v1339 = vmul.f32 %v1325, %v377
    %v1340 = vmul.f32 %v1326, %v373
    %v1341 = vmul.f32 %v1327, %v377
    %v1342 = vmul.f32 %v1328, %v373
    %v1343 = vmul.f32 %v1329, %v377
    %v1344 = vadd.f32 %v1330, %v398
    %v1345 = vadd.f32 %v1331, %v402
    %v1346 = vadd.f32 %v1332, %v398
    %v1347 = vadd.f32 %v1333, %v402
    %v1348 = vadd.f32 %v1334, %v398
    %v1349 = vadd.f32 %v1335, %v402
    %v1350 = vadd.f32 %v1336, %v398
    %v1351 = vadd.f32 %v1337, %v402
    %v1352 = vadd.f32 %v1338, %v398
    %v1353 = vadd.f32 %v1339, %v402
    %v1354 = vadd.f32 %v1340, %v398
    %v1355 = vadd.f32 %v1341, %v402
    %v1356 = vadd.f32 %v1342, %v398
    %v1357 = vadd.f32 %v1343, %v402
    %vm1358 = vcmp.ge.f32.partialorder %v1344, 0.0
    %vm1359 = vcmp.ge.f32.partialorder %v1345, 0.0
    %vm1360 = vcmp.ge.f32.partialorder %v1346, 0.0
    %vm1361 = vcmp.ge.f32.partialorder %v1347, 0.0
    %vm1362 = vcmp.ge.f32.partialorder %v1348, 0.0
    %vm1363 = vcmp.ge.f32.partialorder %v1349, 0.0
    %vm1364 = vcmp.ge.f32.partialorder %v1350, 0.0
    %vm1365 = vcmp.ge.f32.partialorder %v1351, 0.0
    %vm1366 = vcmp.ge.f32.partialorder %v1352, 0.0
    %vm1367 = vcmp.ge.f32.partialorder %v1353, 0.0
    %vm1368 = vcmp.ge.f32.partialorder %v1354, 0.0
    %vm1369 = vcmp.ge.f32.partialorder %v1355, 0.0
    %vm1370 = vcmp.ge.f32.partialorder %v1356, 0.0
    %vm1371 = vcmp.ge.f32.partialorder %v1357, 0.0
    %v1372 = vmul.f32 %v1344, 0.01
    %v1373 = vmul.f32 %v1345, 0.01
    %v1374 = vmul.f32 %v1346, 0.01
    %v1375 = vmul.f32 %v1347, 0.01
    %v1376 = vmul.f32 %v1348, 0.01
    %v1377 = vmul.f32 %v1349, 0.01
    %v1378 = vmul.f32 %v1350, 0.01
    %v1379 = vmul.f32 %v1351, 0.01
    %v1380 = vmul.f32 %v1352, 0.01
    %v1381 = vmul.f32 %v1353, 0.01
    %v1382 = vmul.f32 %v1354, 0.01
    %v1383 = vmul.f32 %v1355, 0.01
    %v1384 = vmul.f32 %v1356, 0.01
    %v1385 = vmul.f32 %v1357, 0.01
    %v1386 = vsel %vm1358, %v1344, %v1372
    %v1387 = vsel %vm1359, %v1345, %v1373
    %v1388 = vsel %vm1360, %v1346, %v1374
    %v1389 = vsel %vm1361, %v1347, %v1375
    %v1390 = vsel %vm1362, %v1348, %v1376
    %v1391 = vsel %vm1363, %v1349, %v1377
    %v1392 = vsel %vm1364, %v1350, %v1378
    %v1393 = vsel %vm1365, %v1351, %v1379
    %v1394 = vsel %vm1366, %v1352, %v1380
    %v1395 = vsel %vm1367, %v1353, %v1381
    %v1396 = vsel %vm1368, %v1354, %v1382
    %v1397 = vsel %vm1369, %v1355, %v1383
    %v1398 = vsel %vm1370, %v1356, %v1384
    %v1399 = vsel %vm1371, %v1357, %v1385
    %v1400 = vpack.c.bf16 %v1388, %v1386
    %v1401 = vpack.c.bf16 %v1389, %v1387
    %v1402 = vpack.c.bf16 %v1392, %v1390
    %v1403 = vpack.c.bf16 %v1393, %v1391
    %v1404 = vpack.c.bf16 %v1396, %v1394
    %v1405 = vpack.c.bf16 %v1397, %v1395
    %v1406 = vpack.c.bf16 %v1398, %v1398
    %v1407 = vpack.c.bf16 %v1399, %v1399
    %1408 = vmatprep.subr.bf16.mxu0 %v577
    %1409 = vmatpush1.bf16.msra.mxu0 %v576
    %1410 = vmatprep.subr.bf16.mxu0 %v579
    %1411 = vmatpush1.bf16.msra.mxu0 %v578
    %1412 = vmatprep.subr.bf16.mxu0 %v581
    %1413 = vmatpush1.bf16.msra.mxu0 %v580
    %1414 = vmatprep.subr.bf16.mxu0 %v583
    %1415 = vmatpush1.bf16.msra.mxu0 %v582
    %1416 = vmatprep.subr.bf16.mxu0 %v585
    %1417 = vmatpush1.bf16.msra.mxu0 %v584
    %1418 = vmatprep.subr.bf16.mxu0 %v587
    %1419 = vmatpush1.bf16.msra.mxu0 %v586
    %1420 = vmatprep.subr.bf16.mxu0 %v589
    %1421 = vmatpush1.bf16.msra.mxu0 %v588
    %1422 = vmatprep.subr.bf16.mxu0 %v591
    %1423 = vmatpush1.bf16.msra.mxu0 %v590
    %1424 = vmatprep.subr.bf16.mxu0 %v593
    %1425 = vmatpush1.bf16.msra.mxu0 %v592
    %1426 = vmatprep.subr.bf16.mxu0 %v595
    %1427 = vmatpush1.bf16.msra.mxu0 %v594
    %1428 = vmatprep.subr.bf16.mxu0 %v597
    %1429 = vmatpush1.bf16.msra.mxu0 %v596
    %1430 = vmatprep.subr.bf16.mxu0 %v599
    %1431 = vmatpush1.bf16.msra.mxu0 %v598
    %1432 = vmatprep.subr.bf16.mxu0 %v601
    %1433 = vmatpush1.bf16.msra.mxu0 %v600
    %1434 = vmatprep.subr.bf16.mxu0 %v603
    %1435 = vmatpush1.bf16.msra.mxu0 %v602
    %1436 = vmatprep.subr.bf16.mxu0 %v605
    %1437 = vmatpush1.bf16.msra.mxu0 %v604
    %1438 = vmatprep.subr.bf16.mxu0 %v607
    %1439 = vmatpush1.bf16.msra.mxu0 %v606
    %1440 = vmatprep.mubr.bf16.mxu0 %v1401
    %1441 = vmatmul.mubr.bf16.gmra.mrb[0].mxu0 %v1400
    %v1442 = vpop.f32.mrb[0].mxu0
    %v1443 = vadd.f32 %v473, %v1442
    %v1444 = vpop.f32.mrb[0].mxu0
    %v1445 = vadd.f32 %v477, %v1444
    %v1446 = vpop.f32.mrb[0].mxu0
    %v1447 = vadd.f32 %v473, %v1446
    %v1448 = vpop.f32.mrb[0].mxu0
    %v1449 = vadd.f32 %v477, %v1448
    %1450 = vmatprep.mubr.bf16.mxu0 %v1403
    %1451 = vmatmul.mubr.bf16.gmra.mrb[0].mxu0 %v1402
    %v1452 = vpop.f32.mrb[0].mxu0
    %v1453 = vadd.f32 %v473, %v1452
    %v1454 = vpop.f32.mrb[0].mxu0
    %v1455 = vadd.f32 %v477, %v1454
    %v1456 = vpop.f32.mrb[0].mxu0
    %v1457 = vadd.f32 %v473, %v1456
    %v1458 = vpop.f32.mrb[0].mxu0
    %v1459 = vadd.f32 %v477, %v1458
    %1460 = vmatprep.mubr.bf16.mxu0 %v1405
    %1461 = vmatmul.mubr.bf16.gmra.mrb[0].mxu0 %v1404
    %v1462 = vpop.f32.mrb[0].mxu0
    %v1463 = vadd.f32 %v473, %v1462
    %v1464 = vpop.f32.mrb[0].mxu0
    %v1465 = vadd.f32 %v477, %v1464
    %v1466 = vpop.f32.mrb[0].mxu0
    %v1467 = vadd.f32 %v473, %v1466
    %v1468 = vpop.f32.mrb[0].mxu0
    %v1469 = vadd.f32 %v477, %v1468
    %1470 = vmatprep.mubr.bf16.mxu0 %v1407
    %1471 = vmatmul.mubr.bf16.gmra.mrb[0].mxu0 %v1406
    %v1472 = vpop.f32.mrb[0].mxu0
    %v1473 = vadd.f32 %v473, %v1472
    %v1474 = vpop.f32.mrb[0].mxu0
    %v1475 = vadd.f32 %v477, %v1474
    %v1476 = vpop.f32.mrb[0].mxu0
    %v1477 = vpop.f32.mrb[0].mxu0
    %1478 = vdwg.mxu0
    %v1479 = vadd.f32 %v1443, %v1445
    %1480 = vadd.xlane.f32.xlu0 %v1479
    %v1481 = vpop.xlane.xlu0 %1480
    %v1482 = vadd.f32 %v1447, %v1449
    %1483 = vadd.xlane.f32.xlu0 %v1482
    %v1484 = vpop.xlane.xlu0 %1483
    %v1485 = vadd.f32 %v1453, %v1455
    %1486 = vadd.xlane.f32.xlu0 %v1485
    %v1487 = vpop.xlane.xlu0 %1486
    %v1488 = vadd.f32 %v1457, %v1459
    %1489 = vadd.xlane.f32.xlu0 %v1488
    %v1490 = vpop.xlane.xlu0 %1489
    %v1491 = vadd.f32 %v1463, %v1465
    %1492 = vadd.xlane.f32.xlu0 %v1491
    %v1493 = vpop.xlane.xlu0 %1492
    %v1494 = vadd.f32 %v1467, %v1469
    %1495 = vadd.xlane.f32.xlu0 %v1494
    %v1496 = vpop.xlane.xlu0 %1495
    %v1497 = vadd.f32 %v1473, %v1475
    %1498 = vadd.xlane.f32.xlu0 %v1497
    %v1499 = vpop.xlane.xlu0 %1498
    %v1500 = vmul.f32 %v1443, %v1443
    %v1501 = vmul.f32 %v1445, %v1445
    %v1502 = vmul.f32 %v1447, %v1447
    %v1503 = vmul.f32 %v1449, %v1449
    %v1504 = vmul.f32 %v1453, %v1453
    %v1505 = vmul.f32 %v1455, %v1455
    %v1506 = vmul.f32 %v1457, %v1457
    %v1507 = vmul.f32 %v1459, %v1459
    %v1508 = vmul.f32 %v1463, %v1463
    %v1509 = vmul.f32 %v1465, %v1465
    %v1510 = vmul.f32 %v1467, %v1467
    %v1511 = vmul.f32 %v1469, %v1469
    %v1512 = vmul.f32 %v1473, %v1473
    %v1513 = vmul.f32 %v1475, %v1475
    %v1514 = vadd.f32 %v1500, %v1501
    %1515 = vadd.xlane.f32.xlu0 %v1514
    %v1516 = vpop.xlane.xlu0 %1515
    %v1517 = vadd.f32 %v1502, %v1503
    %1518 = vadd.xlane.f32.xlu0 %v1517
    %v1519 = vpop.xlane.xlu0 %1518
    %v1520 = vadd.f32 %v1504, %v1505
    %1521 = vadd.xlane.f32.xlu0 %v1520
    %v1522 = vpop.xlane.xlu0 %1521
    %v1523 = vadd.f32 %v1506, %v1507
    %1524 = vadd.xlane.f32.xlu0 %v1523
    %v1525 = vpop.xlane.xlu0 %1524
    %v1526 = vadd.f32 %v1508, %v1509
    %1527 = vadd.xlane.f32.xlu0 %v1526
    %v1528 = vpop.xlane.xlu0 %1527
    %v1529 = vadd.f32 %v1510, %v1511
    %1530 = vadd.xlane.f32.xlu0 %v1529
    %v1531 = vpop.xlane.xlu0 %1530
    %v1532 = vadd.f32 %v1512, %v1513
    %1533 = vadd.xlane.f32.xlu0 %v1532
    %v1534 = vpop.xlane.xlu0 %1533
    %v1535 = vmul.f32 %v1481, 0.00390625
    %v1536 = vmul.f32 %v1484, 0.00390625
    %v1537 = vmul.f32 %v1487, 0.00390625
    %v1538 = vmul.f32 %v1490, 0.00390625
    %v1539 = vmul.f32 %v1493, 0.00390625
    %v1540 = vmul.f32 %v1496, 0.00390625
    %v1541 = vmul.f32 %v1499, 0.00390625
    %v1542 = vmul.f32 %v1516, 0.00390625
    %v1543 = vmul.f32 %v1519, 0.00390625
    %v1544 = vmul.f32 %v1522, 0.00390625
    %v1545 = vmul.f32 %v1525, 0.00390625
    %v1546 = vmul.f32 %v1528, 0.00390625
    %v1547 = vmul.f32 %v1531, 0.00390625
    %v1548 = vmul.f32 %v1534, 0.00390625
    %v1549 = vmul.f32 %v1535, %v1535
    %v1550 = vmul.f32 %v1536, %v1536
    %v1551 = vmul.f32 %v1537, %v1537
    %v1552 = vmul.f32 %v1538, %v1538
    %v1553 = vmul.f32 %v1539, %v1539
    %v1554 = vmul.f32 %v1540, %v1540
    %v1555 = vmul.f32 %v1541, %v1541
    %v1556 = vsub.f32 %v1542, %v1549
    %v1557 = vsub.f32 %v1543, %v1550
    %v1558 = vsub.f32 %v1544, %v1551
    %v1559 = vsub.f32 %v1545, %v1552
    %v1560 = vsub.f32 %v1546, %v1553
    %v1561 = vsub.f32 %v1547, %v1554
    %v1562 = vsub.f32 %v1548, %v1555
    %v1563 = vsub.f32 %v1443, %v1535
    %v1564 = vsub.f32 %v1445, %v1535
    %v1565 = vsub.f32 %v1447, %v1536
    %v1566 = vsub.f32 %v1449, %v1536
    %v1567 = vsub.f32 %v1453, %v1537
    %v1568 = vsub.f32 %v1455, %v1537
    %v1569 = vsub.f32 %v1457, %v1538
    %v1570 = vsub.f32 %v1459, %v1538
    %v1571 = vsub.f32 %v1463, %v1539
    %v1572 = vsub.f32 %v1465, %v1539
    %v1573 = vsub.f32 %v1467, %v1540
    %v1574 = vsub.f32 %v1469, %v1540
    %v1575 = vsub.f32 %v1473, %v1541
    %v1576 = vsub.f32 %v1475, %v1541
    %v1577 = vadd.f32 %v1556, 1e-05
    %v1578 = vadd.f32 %v1557, 1e-05
    %v1579 = vadd.f32 %v1558, 1e-05
    %v1580 = vadd.f32 %v1559, 1e-05
    %v1581 = vadd.f32 %v1560, 1e-05
    %v1582 = vadd.f32 %v1561, 1e-05
    %v1583 = vadd.f32 %v1562, 1e-05
    %v1584 = vrsqrt.pop %v1577
    %v1585 = vrsqrt.pop %v1578
    %v1586 = vrsqrt.pop %v1579
    %v1587 = vrsqrt.pop %v1580
    %v1588 = vrsqrt.pop %v1581
    %v1589 = vrsqrt.pop %v1582
    %v1590 = vrsqrt.pop %v1583
    %v1591 = vmul.f32 %v1563, %v1584
    %v1592 = vmul.f32 %v1564, %v1584
    %v1593 = vmul.f32 %v1565, %v1585
    %v1594 = vmul.f32 %v1566, %v1585
    %v1595 = vmul.f32 %v1567, %v1586
    %v1596 = vmul.f32 %v1568, %v1586
    %v1597 = vmul.f32 %v1569, %v1587
    %v1598 = vmul.f32 %v1570, %v1587
    %v1599 = vmul.f32 %v1571, %v1588
    %v1600 = vmul.f32 %v1572, %v1588
    %v1601 = vmul.f32 %v1573, %v1589
    %v1602 = vmul.f32 %v1574, %v1589
    %v1603 = vmul.f32 %v1575, %v1590
    %v1604 = vmul.f32 %v1576, %v1590
    %v1605 = vmul.f32 %v1591, %v841
    %v1606 = vmul.f32 %v1592, %v845
    %v1607 = vmul.f32 %v1593, %v841
    %v1608 = vmul.f32 %v1594, %v845
    %v1609 = vmul.f32 %v1595, %v841
    %v1610 = vmul.f32 %v1596, %v845
    %v1611 = vmul.f32 %v1597, %v841
    %v1612 = vmul.f32 %v1598, %v845
    %v1613 = vmul.f32 %v1599, %v841
    %v1614 = vmul.f32 %v1600, %v845
    %v1615 = vmul.f32 %v1601, %v841
    %v1616 = vmul.f32 %v1602, %v845
    %v1617 = vmul.f32 %v1603, %v841
    %v1618 = vmul.f32 %v1604, %v845
    %v1619 = vadd.f32 %v1605, %v866
    %v1620 = vadd.f32 %v1606, %v870
    %v1621 = vadd.f32 %v1607, %v866
    %v1622 = vadd.f32 %v1608, %v870
    %v1623 = vadd.f32 %v1609, %v866
    %v1624 = vadd.f32 %v1610, %v870
    %v1625 = vadd.f32 %v1611, %v866
    %v1626 = vadd.f32 %v1612, %v870
    %v1627 = vadd.f32 %v1613, %v866
    %v1628 = vadd.f32 %v1614, %v870
    %v1629 = vadd.f32 %v1615, %v866
    %v1630 = vadd.f32 %v1616, %v870
    %v1631 = vadd.f32 %v1617, %v866
    %v1632 = vadd.f32 %v1618, %v870
    %vm1633 = vcmp.ge.f32.partialorder %v1619, 0.0
    %vm1634 = vcmp.ge.f32.partialorder %v1620, 0.0
    %vm1635 = vcmp.ge.f32.partialorder %v1621, 0.0
    %vm1636 = vcmp.ge.f32.partialorder %v1622, 0.0
    %vm1637 = vcmp.ge.f32.partialorder %v1623, 0.0
    %vm1638 = vcmp.ge.f32.partialorder %v1624, 0.0
    %vm1639 = vcmp.ge.f32.partialorder %v1625, 0.0
    %vm1640 = vcmp.ge.f32.partialorder %v1626, 0.0
    %vm1641 = vcmp.ge.f32.partialorder %v1627, 0.0
    %vm1642 = vcmp.ge.f32.partialorder %v1628, 0.0
    %vm1643 = vcmp.ge.f32.partialorder %v1629, 0.0
    %vm1644 = vcmp.ge.f32.partialorder %v1630, 0.0
    %vm1645 = vcmp.ge.f32.partialorder %v1631, 0.0
    %vm1646 = vcmp.ge.f32.partialorder %v1632, 0.0
    %v1647 = vmul.f32 %v1619, 0.01
    %v1648 = vmul.f32 %v1620, 0.01
    %v1649 = vmul.f32 %v1621, 0.01
    %v1650 = vmul.f32 %v1622, 0.01
    %v1651 = vmul.f32 %v1623, 0.01
    %v1652 = vmul.f32 %v1624, 0.01
    %v1653 = vmul.f32 %v1625, 0.01
    %v1654 = vmul.f32 %v1626, 0.01
    %v1655 = vmul.f32 %v1627, 0.01
    %v1656 = vmul.f32 %v1628, 0.01
    %v1657 = vmul.f32 %v1629, 0.01
    %v1658 = vmul.f32 %v1630, 0.01
    %v1659 = vmul.f32 %v1631, 0.01
    %v1660 = vmul.f32 %v1632, 0.01
    %v1661 = vsel %vm1633, %v1619, %v1647
    %v1662 = vsel %vm1634, %v1620, %v1648
    %v1663 = vsel %vm1635, %v1621, %v1649
    %v1664 = vsel %vm1636, %v1622, %v1650
    %v1665 = vsel %vm1637, %v1623, %v1651
    %v1666 = vsel %vm1638, %v1624, %v1652
    %v1667 = vsel %vm1639, %v1625, %v1653
    %v1668 = vsel %vm1640, %v1626, %v1654
    %v1669 = vsel %vm1641, %v1627, %v1655
    %v1670 = vsel %vm1642, %v1628, %v1656
    %v1671 = vsel %vm1643, %v1629, %v1657
    %v1672 = vsel %vm1644, %v1630, %v1658
    %v1673 = vsel %vm1645, %v1631, %v1659
    %v1674 = vsel %vm1646, %v1632, %v1660
    %v1675 = vpack.c.bf16 %v1663, %v1661
    %v1676 = vpack.c.bf16 %v1664, %v1662
    %v1677 = vpack.c.bf16 %v1667, %v1665
    %v1678 = vpack.c.bf16 %v1668, %v1666
    %v1679 = vpack.c.bf16 %v1671, %v1669
    %v1680 = vpack.c.bf16 %v1672, %v1670
    %v1681 = vpack.c.bf16 %v1673, %v1673
    %v1682 = vpack.c.bf16 %v1674, %v1674
    %1683 = vmatprep.subr.bf16.mxu0 0
    %1684 = vmatpush1.bf16.msra.mxu0 %v1007
    %1685 = vmatprep.subr.bf16.mxu0 0
    %1686 = vmatpush1.bf16.msra.mxu0 %v1008
    %1687 = vmatprep.subr.bf16.mxu0 0
    %1688 = vmatpush1.bf16.msra.mxu0 %v1009
    %1689 = vmatprep.subr.bf16.mxu0 0
    %1690 = vmatpush1.bf16.msra.mxu0 %v1010
    %1691 = vmatprep.subr.bf16.mxu0 0
    %1692 = vmatpush1.bf16.msra.mxu0 %v1011
    %1693 = vmatprep.subr.bf16.mxu0 0
    %1694 = vmatpush1.bf16.msra.mxu0 %v1012
    %1695 = vmatprep.subr.bf16.mxu0 0
    %1696 = vmatpush1.bf16.msra.mxu0 %v1013
    %1697 = vmatprep.subr.bf16.mxu0 0
    %1698 = vmatpush1.bf16.msra.mxu0 %v1014
    %1699 = vmatprep.subr.bf16.mxu0 0
    %1700 = vmatpush1.bf16.msra.mxu0 %v1015
    %1701 = vmatprep.subr.bf16.mxu0 0
    %1702 = vmatpush1.bf16.msra.mxu0 %v1016
    %1703 = vmatprep.subr.bf16.mxu0 0
    %1704 = vmatpush1.bf16.msra.mxu0 %v1017
    %1705 = vmatprep.subr.bf16.mxu0 0
    %1706 = vmatpush1.bf16.msra.mxu0 %v1018
    %1707 = vmatprep.subr.bf16.mxu0 0
    %1708 = vmatpush1.bf16.msra.mxu0 %v1019
    %1709 = vmatprep.subr.bf16.mxu0 0
    %1710 = vmatpush1.bf16.msra.mxu0 %v1020
    %1711 = vmatprep.subr.bf16.mxu0 0
    %1712 = vmatpush1.bf16.msra.mxu0 %v1021
    %1713 = vmatprep.subr.bf16.mxu0 0
    %1714 = vmatpush1.bf16.msra.mxu0 %v1022
    %1715 = vmatprep.mubr.bf16.mxu0 %v1676
    %1716 = vmatmul.mubr.bf16.gmra.mrb[0].mxu0 %v1675
    %v1717 = vpop.f32.mrb[0].mxu0
    %v1718 = vadd.f32 %v941, %v1717
    %v1719 = vpop.f32.mrb[0].mxu0
    %v1720 = vpop.f32.mrb[0].mxu0
    %v1721 = vadd.f32 %v941, %v1720
    %v1722 = vpop.f32.mrb[0].mxu0
    %1723 = vmatprep.mubr.bf16.mxu0 %v1678
    %1724 = vmatmul.mubr.bf16.gmra.mrb[0].mxu0 %v1677
    %v1725 = vpop.f32.mrb[0].mxu0
    %v1726 = vadd.f32 %v941, %v1725
    %v1727 = vpop.f32.mrb[0].mxu0
    %v1728 = vpop.f32.mrb[0].mxu0
    %v1729 = vadd.f32 %v941, %v1728
    %v1730 = vpop.f32.mrb[0].mxu0
    %1731 = vmatprep.mubr.bf16.mxu0 %v1680
    %1732 = vmatmul.mubr.bf16.gmra.mrb[0].mxu0 %v1679
    %v1733 = vpop.f32.mrb[0].mxu0
    %v1734 = vadd.f32 %v941, %v1733
    %v1735 = vpop.f32.mrb[0].mxu0
    %v1736 = vpop.f32.mrb[0].mxu0
    %v1737 = vadd.f32 %v941, %v1736
    %v1738 = vpop.f32.mrb[0].mxu0
    %1739 = vmatprep.mubr.bf16.mxu0 %v1682
    %1740 = vmatmul.mubr.bf16.gmra.mrb[0].mxu0 %v1681
    %v1741 = vpop.f32.mrb[0].mxu0
    %v1742 = vadd.f32 %v941, %v1741
    %v1743 = vpop.f32.mrb[0].mxu0
    %v1744 = vpop.f32.mrb[0].mxu0
    %v1745 = vpop.f32.mrb[0].mxu0
    %1746 = vdwg.mxu0
    %1747 = vst [vmem:[#allocation5 + $0x38] sm:$0xff] %v1718
    %1748 = vst [vmem:[#allocation5 + $0x40] sm:$0xff] %v1721
    %1749 = vst [vmem:[#allocation5 + $0x48] sm:$0xff] %v1726
    %1750 = vst [vmem:[#allocation5 + $0x50] sm:$0xff] %v1729
    %1751 = vst [vmem:[#allocation5 + $0x58] sm:$0xff] %v1734
    %1752 = vst [vmem:[#allocation5 + $0x60] sm:$0xff] %v1737
    %1753 = vst [vmem:[#allocation5 + $0x68] sm:$0xff] %v1742
    // Predicated region
    $region50: #{tpu_custom_call.1} parent=1 // pred_check
      _
    $region51: #{tpu_custom_call.1} parent=1 // pred_check_branch
      %1755 = sbr.rel (0) target = $region53
    $region52: #{tpu_custom_call.1} parent=1 // pred_region
      %s1757 = ssub.s32 1792, 1792
      %1758 = vsyncadd [#allocation4], %s1757
      %s1759 = sshll.u32 [#allocation5], 4
      %s1760 = int_to_ptr.vmem [resolvable:$true] %s1759
      %1765 = dma.vmem_to_hbm [thread:$0]  %s1760, 1792, %s11, [#allocation4], 128, 128, 8
    $region53: #{tpu_custom_call.1} parent=1 // pred_fallthru
      _
    // Predicated region
    $region54: #{tpu_custom_call.1} parent=1 // pred_check
      _
    $region55: #{tpu_custom_call.1} parent=1 // pred_check_branch
      %1767 = sbr.rel (0) target = $region57
    $region56: #{tpu_custom_call.1} parent=1 // pred_region
      %1768 = dma.done [#allocation4], 1792
    $region57: #{tpu_custom_call.1} parent=1 // pred_fallthru
      _
    %1769 = vsyncpa [#allocation3], 1
    %1770 = vsyncpa [#allocation4], 1

</llo_original>
